<compile_context>
chip_gen: v6e
topology: v6e:2x2x1
jax: 0.10.0
libtpu: 0.0.40
codegen_flags: <defaults>
</compile_context>

<pallas_src>
import jax
import jax.numpy as jnp
import numpy as np
from jax import lax
from jax.experimental import pallas as pl
from jax.experimental.pallas import tpu as pltpu

EPS = 1e-5  # nn.InstanceNorm2d default eps


# ----------------------------------------------------------------------------
# Constant-matrix construction (wrapper side, pure XLA / numpy glue).
# ----------------------------------------------------------------------------
def _pack_factor(B, W, C):
    """Smallest image count packed along the lane axis making the working lane
    width a multiple of 128 (full vregs, unmasked loads/stores)."""
    wc = W * C
    if wc % 128 == 0:
        return 1
    for p in range(2, B + 1):
        if B % p == 0 and (p * wc) % 128 == 0 and p * wc <= 1024:
            return p
    return 1


def _reflect_band_weight(w_hwio, W):
    """(3,3,Cin,Cout) HWIO -> (3, W*Cin, W*Cout): per-dy lane-dim operator that
    applies the dx taps *and* the W-direction reflect padding (pad=1)."""
    kh, kw, cin, cout = w_hwio.shape
    refl = np.concatenate([[1], np.arange(W), [W - 2]])  # reflect map, padded col
    sel = np.zeros((kw, W, W), np.float32)               # sel[dx, w_src, w_out]
    for dx in range(kw):
        for w in range(W):
            sel[dx, refl[w + dx], w] += 1.0
    band = jnp.einsum("xuw,dxio->duiwo", jnp.asarray(sel), w_hwio)
    return band.reshape(kh, W * cin, W * cout)


def _block_diag(mats, P):
    """(kh, M, N) -> (kh, P*M, P*N) block-diagonal (one block per packed image)."""
    kh, M, N = mats.shape
    out = jnp.zeros((kh, P * M, P * N), mats.dtype)
    for p in range(P):
        out = out.at[:, p * M:(p + 1) * M, p * N:(p + 1) * N].set(mats)
    return out


def _row_shift_mats(H):
    """(2, H, H) reflect row-shift matrices for the dy=0 and dy=2 conv taps."""
    refl = np.concatenate([[1], np.arange(H), [H - 2]])
    D = np.zeros((H, H), np.float32)  # out[h] += S0[reflectH(h + 0)]
    U = np.zeros((H, H), np.float32)  # out[h] += S2[reflectH(h + 2)]
    for h in range(H):
        D[h, refl[h]] = 1.0
        U[h, refl[h + 2]] = 1.0
    return jnp.asarray(np.stack([D, U]))


def _norm_selector(H, W, C, P):
    """(L, L) selector: sel[i, j] = 1/(H*W) iff lanes i, j belong to the same
    packed image and the same channel.  col_sums @ sel == per-lane channel mean."""
    wc = W * C
    idx = np.arange(P * wc)
    same = ((idx[:, None] // wc) == (idx[None, :] // wc)) & \
           ((idx[:, None] % C) == (idx[None, :] % C))
    return jnp.asarray(same.astype(np.float32) / float(H * W))


# ----------------------------------------------------------------------------
# Kernel
# ----------------------------------------------------------------------------
def _make_basic_block_kernel(H, W, C, P):
    del W, C, P  # geometry is fully encoded in the constant matrices

    def conv3x3(y, bp_ref, du_ref):
        # y: (H, L). Reflect-padded 3x3 conv as 5 MXU matmuls: lane taps +
        # W-reflect live in bp (banded, block-diag over packed images); the
        # H-reflect/dy taps are the two constant row-shift matrices.
        s0 = jnp.dot(y, bp_ref[0], preferred_element_type=jnp.float32)
        s1 = jnp.dot(y, bp_ref[1], preferred_element_type=jnp.float32)
        s2 = jnp.dot(y, bp_ref[2], preferred_element_type=jnp.float32)
        s0 = jnp.dot(du_ref[0], s0, preferred_element_type=jnp.float32)
        s2 = jnp.dot(du_ref[1], s2, preferred_element_type=jnp.float32)
        return s1 + s0 + s2

    def instance_norm(y, sel):
        # One-pass stats in f32; sel folds the per-(image, channel) averaging
        # and the broadcast back to lanes into a single tiny matmul.
        col_s = jnp.sum(y, axis=0, keepdims=True)        # (1, L)
        col_ss = jnp.sum(y * y, axis=0, keepdims=True)   # (1, L)
        mean = jnp.dot(col_s, sel, preferred_element_type=jnp.float32)
        ex2 = jnp.dot(col_ss, sel, preferred_element_type=jnp.float32)
        inv = lax.rsqrt(ex2 - mean * mean + EPS)
        return (y - mean) * inv

    def kernel(x_ref, bp1_ref, bp2_ref, du_ref, sel_ref, o_ref):
        x = x_ref[...]                                    # (H, L) lane-dense
        sel = sel_ref[...]
        y = jnp.maximum(instance_norm(conv3x3(x, bp1_ref, du_ref), sel), 0.0)
        z = instance_norm(conv3x3(y, bp2_ref, du_ref), sel)
        o_ref[...] = jnp.maximum(z + x, 0.0)              # unmasked vst

    return kernel


# ----------------------------------------------------------------------------
# Wrapper
# ----------------------------------------------------------------------------
@jax.jit
def basic_block(x_nchw, w1, b1, w2, b2):
    """Pallas BasicBlock forward. x_nchw: (B, C, H, W) f32; returns (B, C, H, W).

    b1/b2 are accepted for interface parity but intentionally unused: a
    per-channel bias followed immediately by a parameter-free InstanceNorm is
    cancelled exactly."""
    del b1, b2
    x = jnp.transpose(x_nchw, (0, 2, 3, 1)).astype(jnp.float32)  # NHWC
    B, H, W, C = x.shape
    assert H >= 2 and W >= 2, "reflect padding (pad=1) needs H, W >= 2"

    P = _pack_factor(B, W, C)
    G = B // P
    L = P * W * C

    # Pack P images along the lane axis: lane j -> (img j//(W*C), w, c).
    x_packed = (x.reshape(G, P, H, W, C)
                 .transpose(0, 2, 1, 3, 4)
                 .reshape(G, H, L))

    bp1 = _block_diag(_reflect_band_weight(w1.astype(jnp.float32), W), P)
    bp2 = _block_diag(_reflect_band_weight(w2.astype(jnp.float32), W), P)
    du = _row_shift_mats(H)
    sel = _norm_selector(H, W, C, P)

    kernel = _make_basic_block_kernel(H, W, C, P)

    out_packed = pl.pallas_call(
        kernel,
        out_shape=jax.ShapeDtypeStruct((G, H, L), jnp.float32),
        grid=(G,),
        in_specs=[
            pl.BlockSpec((None, H, L), lambda g: (g, 0, 0)),
            pl.BlockSpec((3, L, L), lambda g: (0, 0, 0)),
            pl.BlockSpec((3, L, L), lambda g: (0, 0, 0)),
            pl.BlockSpec((2, H, H), lambda g: (0, 0, 0)),
            pl.BlockSpec((L, L), lambda g: (0, 0)),
        ],
        out_specs=pl.BlockSpec((None, H, L), lambda g: (g, 0, 0)),
        compiler_params=pltpu.CompilerParams(
            dimension_semantics=("parallel",),
            vmem_limit_bytes=64 * 1024 * 1024,
        ),
    )(x_packed, bp1, bp2, du, sel)

    out = (out_packed.reshape(G, H, P, W, C)
                     .transpose(0, 2, 1, 3, 4)
                     .reshape(B, H, W, C))
    return jnp.transpose(out, (0, 3, 1, 2))  # back to NCHW


# ----------------------------------------------------------------------------
# Pure-JAX reference (mirrors the PyTorch forward, biases included).
# ----------------------------------------------------------------------------
def ref_basic_block(x_nchw, w1, b1, w2, b2):
    x = jnp.transpose(x_nchw, (0, 2, 3, 1)).astype(jnp.float32)

    def conv(inp, w, b):
        p = jnp.pad(inp, ((0, 0), (1, 1), (1, 1), (0, 0)), mode="reflect")
        y = lax.conv_general_dilated(
            p, w, (1, 1), "VALID", dimension_numbers=("NHWC", "HWIO", "NHWC"))
        return y + b.reshape(1, 1, 1, -1)

    def inorm(y):
        m = jnp.mean(y, axis=(1, 2), keepdims=True)
        v = jnp.mean((y - m) ** 2, axis=(1, 2), keepdims=True)
        return (y - m) * lax.rsqrt(v + EPS)

    out = jax.nn.relu(inorm(conv(x, w1, b1)))
    out = inorm(conv(out, w2, b2)) + x
    out = jax.nn.relu(out)
    return jnp.transpose(out, (0, 3, 1, 2))


if __name__ == "__main__":
    B, C, H, W = 2, 4, 16, 16  # inplanes == planes, stride=1, downsample=None
    key = jax.random.PRNGKey(0)
    kx, kw1, kb1, kw2, kb2 = jax.random.split(key, 5)

    x = jax.random.normal(kx, (B, C, H, W), jnp.float32)
    fan_in = C * 3 * 3
    w1 = jax.random.normal(kw1, (3, 3, C, C), jnp.float32) / np.sqrt(fan_in)
    b1 = 0.1 * jax.random.normal(kb1, (C,), jnp.float32)
    w2 = jax.random.normal(kw2, (3, 3, C, C), jnp.float32) / np.sqrt(fan_in)
    b2 = 0.1 * jax.random.normal(kb2, (C,), jnp.float32)

    out = jax.block_until_ready(basic_block(x, w1, b1, w2, b2))
    ref = jax.block_until_ready(ref_basic_block(x, w1, b1, w2, b2))
    np.testing.assert_allclose(np.asarray(out), np.asarray(ref),
                               rtol=5e-4, atol=5e-4)
    print("KERNEL_OK")
</pallas_src>

<mosaic_0001>
module attributes {stable_mosaic.version = 11 : i64} {
  func.func @kernel(%arg0: i32, %arg1: memref<1x16x128xf32, #tpu.memory_space<vmem>>, %arg2: memref<3x128x128xf32, #tpu.memory_space<vmem>>, %arg3: memref<3x128x128xf32, #tpu.memory_space<vmem>>, %arg4: memref<2x16x16xf32, #tpu.memory_space<vmem>>, %arg5: memref<128x128xf32, #tpu.memory_space<vmem>>, %arg6: memref<1x16x128xf32, #tpu.memory_space<vmem>>) attributes {dimension_semantics = [#tpu.dimension_semantics<parallel>], iteration_bounds = array<i64: 1>, scalar_prefetch = 0 : i64, scratch_operands = 0 : i64, tpu.core_type = #tpu.core_type<tc>, window_params = [{transform_indices = @transform_0, window_bounds = array<i64: 1, 16, 128>}, {pipeline_mode = #tpu.pipeline_mode<synchronous>, transform_indices = @transform_1, window_bounds = array<i64: 3, 128, 128>}, {pipeline_mode = #tpu.pipeline_mode<synchronous>, transform_indices = @transform_2, window_bounds = array<i64: 3, 128, 128>}, {pipeline_mode = #tpu.pipeline_mode<synchronous>, transform_indices = @transform_3, window_bounds = array<i64: 2, 16, 16>}, {pipeline_mode = #tpu.pipeline_mode<synchronous>, transform_indices = @transform_4, window_bounds = array<i64: 128, 128>}, {transform_indices = @transform_5, window_bounds = array<i64: 1, 16, 128>}]} {
    %c0 = arith.constant 0 : index
    %c0_0 = arith.constant 0 : index
    %c0_1 = arith.constant 0 : index
    %0 = vector.load %arg1[%c0, %c0_0, %c0_1] : memref<1x16x128xf32, #tpu.memory_space<vmem>>, vector<1x16x128xf32>
    %1 = vector.shape_cast %0 : vector<1x16x128xf32> to vector<16x128xf32>
    %c0_2 = arith.constant 0 : index
    %c0_3 = arith.constant 0 : index
    %2 = vector.load %arg5[%c0_2, %c0_3] : memref<128x128xf32, #tpu.memory_space<vmem>>, vector<128x128xf32>
    %c0_4 = arith.constant 0 : index
    %c0_5 = arith.constant 0 : index
    %c0_6 = arith.constant 0 : index
    %3 = vector.load %arg2[%c0_4, %c0_5, %c0_6] : memref<3x128x128xf32, #tpu.memory_space<vmem>>, vector<1x128x128xf32>
    %4 = vector.shape_cast %3 : vector<1x128x128xf32> to vector<128x128xf32>
    %cst = arith.constant dense<0.000000e+00> : vector<16x128xf32>
    %5 = tpu.matmul %1, %4, %cst {dimension_numbers = #tpu.dot_dimension_numbers<[1], [0], [0], [1], [0, 0, 1, 1], [], []>} : vector<16x128xf32>, vector<128x128xf32>, vector<16x128xf32> -> vector<16x128xf32>
    %c1 = arith.constant 1 : index
    %c0_7 = arith.constant 0 : index
    %c0_8 = arith.constant 0 : index
    %6 = vector.load %arg2[%c1, %c0_7, %c0_8] : memref<3x128x128xf32, #tpu.memory_space<vmem>>, vector<1x128x128xf32>
    %7 = vector.shape_cast %6 : vector<1x128x128xf32> to vector<128x128xf32>
    %cst_9 = arith.constant dense<0.000000e+00> : vector<16x128xf32>
    %8 = tpu.matmul %1, %7, %cst_9 {dimension_numbers = #tpu.dot_dimension_numbers<[1], [0], [0], [1], [0, 0, 1, 1], [], []>} : vector<16x128xf32>, vector<128x128xf32>, vector<16x128xf32> -> vector<16x128xf32>
    %c2 = arith.constant 2 : index
    %c0_10 = arith.constant 0 : index
    %c0_11 = arith.constant 0 : index
    %9 = vector.load %arg2[%c2, %c0_10, %c0_11] : memref<3x128x128xf32, #tpu.memory_space<vmem>>, vector<1x128x128xf32>
    %10 = vector.shape_cast %9 : vector<1x128x128xf32> to vector<128x128xf32>
    %cst_12 = arith.constant dense<0.000000e+00> : vector<16x128xf32>
    %11 = tpu.matmul %1, %10, %cst_12 {dimension_numbers = #tpu.dot_dimension_numbers<[1], [0], [0], [1], [0, 0, 1, 1], [], []>} : vector<16x128xf32>, vector<128x128xf32>, vector<16x128xf32> -> vector<16x128xf32>
    %c0_13 = arith.constant 0 : index
    %c0_14 = arith.constant 0 : index
    %c0_15 = arith.constant 0 : index
    %12 = vector.load %arg4[%c0_13, %c0_14, %c0_15] : memref<2x16x16xf32, #tpu.memory_space<vmem>>, vector<1x16x16xf32>
    %13 = vector.shape_cast %12 : vector<1x16x16xf32> to vector<16x16xf32>
    %cst_16 = arith.constant dense<0.000000e+00> : vector<16x128xf32>
    %14 = tpu.matmul %13, %5, %cst_16 {dimension_numbers = #tpu.dot_dimension_numbers<[1], [0], [0], [1], [0, 0, 1, 1], [], []>} : vector<16x16xf32>, vector<16x128xf32>, vector<16x128xf32> -> vector<16x128xf32>
    %c1_17 = arith.constant 1 : index
    %c0_18 = arith.constant 0 : index
    %c0_19 = arith.constant 0 : index
    %15 = vector.load %arg4[%c1_17, %c0_18, %c0_19] : memref<2x16x16xf32, #tpu.memory_space<vmem>>, vector<1x16x16xf32>
    %16 = vector.shape_cast %15 : vector<1x16x16xf32> to vector<16x16xf32>
    %cst_20 = arith.constant dense<0.000000e+00> : vector<16x128xf32>
    %17 = tpu.matmul %16, %11, %cst_20 {dimension_numbers = #tpu.dot_dimension_numbers<[1], [0], [0], [1], [0, 0, 1, 1], [], []>} : vector<16x16xf32>, vector<16x128xf32>, vector<16x128xf32> -> vector<16x128xf32>
    %18 = arith.addf %8, %14 : vector<16x128xf32>
    %19 = arith.addf %18, %17 : vector<16x128xf32>
    %cst_21 = arith.constant dense<0.000000e+00> : vector<128xf32>
    %20 = vector.multi_reduction <add>, %19, %cst_21 [0] : vector<16x128xf32> to vector<128xf32>
    %21 = vector.shape_cast %20 : vector<128xf32> to vector<1x128xf32>
    %22 = arith.mulf %19, %19 : vector<16x128xf32>
    %cst_22 = arith.constant dense<0.000000e+00> : vector<128xf32>
    %23 = vector.multi_reduction <add>, %22, %cst_22 [0] : vector<16x128xf32> to vector<128xf32>
    %24 = vector.shape_cast %23 : vector<128xf32> to vector<1x128xf32>
    %cst_23 = arith.constant dense<0.000000e+00> : vector<1x128xf32>
    %25 = tpu.matmul %21, %2, %cst_23 {dimension_numbers = #tpu.dot_dimension_numbers<[1], [0], [0], [1], [0, 0, 1, 1], [], []>} : vector<1x128xf32>, vector<128x128xf32>, vector<1x128xf32> -> vector<1x128xf32>
    %cst_24 = arith.constant dense<0.000000e+00> : vector<1x128xf32>
    %26 = tpu.matmul %24, %2, %cst_24 {dimension_numbers = #tpu.dot_dimension_numbers<[1], [0], [0], [1], [0, 0, 1, 1], [], []>} : vector<1x128xf32>, vector<128x128xf32>, vector<1x128xf32> -> vector<1x128xf32>
    %27 = arith.mulf %25, %25 : vector<1x128xf32>
    %28 = arith.subf %26, %27 : vector<1x128xf32>
    %cst_25 = arith.constant 9.99999974E-6 : f32
    %29 = vector.broadcast %cst_25 : f32 to vector<1x128xf32>
    %30 = arith.addf %28, %29 : vector<1x128xf32>
    %31 = math.rsqrt %30 : vector<1x128xf32>
    %32 = vector.broadcast %25 : vector<1x128xf32> to vector<16x128xf32>
    %33 = arith.subf %19, %32 : vector<16x128xf32>
    %34 = vector.broadcast %31 : vector<1x128xf32> to vector<16x128xf32>
    %35 = arith.mulf %33, %34 : vector<16x128xf32>
    %cst_26 = arith.constant 0.000000e+00 : f32
    %36 = vector.broadcast %cst_26 : f32 to vector<16x128xf32>
    %37 = arith.maximumf %35, %36 : vector<16x128xf32>
    %c0_27 = arith.constant 0 : index
    %c0_28 = arith.constant 0 : index
    %c0_29 = arith.constant 0 : index
    %38 = vector.load %arg3[%c0_27, %c0_28, %c0_29] : memref<3x128x128xf32, #tpu.memory_space<vmem>>, vector<1x128x128xf32>
    %39 = vector.shape_cast %38 : vector<1x128x128xf32> to vector<128x128xf32>
    %cst_30 = arith.constant dense<0.000000e+00> : vector<16x128xf32>
    %40 = tpu.matmul %37, %39, %cst_30 {dimension_numbers = #tpu.dot_dimension_numbers<[1], [0], [0], [1], [0, 0, 1, 1], [], []>} : vector<16x128xf32>, vector<128x128xf32>, vector<16x128xf32> -> vector<16x128xf32>
    %c1_31 = arith.constant 1 : index
    %c0_32 = arith.constant 0 : index
    %c0_33 = arith.constant 0 : index
    %41 = vector.load %arg3[%c1_31, %c0_32, %c0_33] : memref<3x128x128xf32, #tpu.memory_space<vmem>>, vector<1x128x128xf32>
    %42 = vector.shape_cast %41 : vector<1x128x128xf32> to vector<128x128xf32>
    %cst_34 = arith.constant dense<0.000000e+00> : vector<16x128xf32>
    %43 = tpu.matmul %37, %42, %cst_34 {dimension_numbers = #tpu.dot_dimension_numbers<[1], [0], [0], [1], [0, 0, 1, 1], [], []>} : vector<16x128xf32>, vector<128x128xf32>, vector<16x128xf32> -> vector<16x128xf32>
    %c2_35 = arith.constant 2 : index
    %c0_36 = arith.constant 0 : index
    %c0_37 = arith.constant 0 : index
    %44 = vector.load %arg3[%c2_35, %c0_36, %c0_37] : memref<3x128x128xf32, #tpu.memory_space<vmem>>, vector<1x128x128xf32>
    %45 = vector.shape_cast %44 : vector<1x128x128xf32> to vector<128x128xf32>
    %cst_38 = arith.constant dense<0.000000e+00> : vector<16x128xf32>
    %46 = tpu.matmul %37, %45, %cst_38 {dimension_numbers = #tpu.dot_dimension_numbers<[1], [0], [0], [1], [0, 0, 1, 1], [], []>} : vector<16x128xf32>, vector<128x128xf32>, vector<16x128xf32> -> vector<16x128xf32>
    %c0_39 = arith.constant 0 : index
    %c0_40 = arith.constant 0 : index
    %c0_41 = arith.constant 0 : index
    %47 = vector.load %arg4[%c0_39, %c0_40, %c0_41] : memref<2x16x16xf32, #tpu.memory_space<vmem>>, vector<1x16x16xf32>
    %48 = vector.shape_cast %47 : vector<1x16x16xf32> to vector<16x16xf32>
    %cst_42 = arith.constant dense<0.000000e+00> : vector<16x128xf32>
    %49 = tpu.matmul %48, %40, %cst_42 {dimension_numbers = #tpu.dot_dimension_numbers<[1], [0], [0], [1], [0, 0, 1, 1], [], []>} : vector<16x16xf32>, vector<16x128xf32>, vector<16x128xf32> -> vector<16x128xf32>
    %c1_43 = arith.constant 1 : index
    %c0_44 = arith.constant 0 : index
    %c0_45 = arith.constant 0 : index
    %50 = vector.load %arg4[%c1_43, %c0_44, %c0_45] : memref<2x16x16xf32, #tpu.memory_space<vmem>>, vector<1x16x16xf32>
    %51 = vector.shape_cast %50 : vector<1x16x16xf32> to vector<16x16xf32>
    %cst_46 = arith.constant dense<0.000000e+00> : vector<16x128xf32>
    %52 = tpu.matmul %51, %46, %cst_46 {dimension_numbers = #tpu.dot_dimension_numbers<[1], [0], [0], [1], [0, 0, 1, 1], [], []>} : vector<16x16xf32>, vector<16x128xf32>, vector<16x128xf32> -> vector<16x128xf32>
    %53 = arith.addf %43, %49 : vector<16x128xf32>
    %54 = arith.addf %53, %52 : vector<16x128xf32>
    %cst_47 = arith.constant dense<0.000000e+00> : vector<128xf32>
    %55 = vector.multi_reduction <add>, %54, %cst_47 [0] : vector<16x128xf32> to vector<128xf32>
    %56 = vector.shape_cast %55 : vector<128xf32> to vector<1x128xf32>
    %57 = arith.mulf %54, %54 : vector<16x128xf32>
    %cst_48 = arith.constant dense<0.000000e+00> : vector<128xf32>
    %58 = vector.multi_reduction <add>, %57, %cst_48 [0] : vector<16x128xf32> to vector<128xf32>
    %59 = vector.shape_cast %58 : vector<128xf32> to vector<1x128xf32>
    %cst_49 = arith.constant dense<0.000000e+00> : vector<1x128xf32>
    %60 = tpu.matmul %56, %2, %cst_49 {dimension_numbers = #tpu.dot_dimension_numbers<[1], [0], [0], [1], [0, 0, 1, 1], [], []>} : vector<1x128xf32>, vector<128x128xf32>, vector<1x128xf32> -> vector<1x128xf32>
    %cst_50 = arith.constant dense<0.000000e+00> : vector<1x128xf32>
    %61 = tpu.matmul %59, %2, %cst_50 {dimension_numbers = #tpu.dot_dimension_numbers<[1], [0], [0], [1], [0, 0, 1, 1], [], []>} : vector<1x128xf32>, vector<128x128xf32>, vector<1x128xf32> -> vector<1x128xf32>
    %62 = arith.mulf %60, %60 : vector<1x128xf32>
    %63 = arith.subf %61, %62 : vector<1x128xf32>
    %cst_51 = arith.constant 9.99999974E-6 : f32
    %64 = vector.broadcast %cst_51 : f32 to vector<1x128xf32>
    %65 = arith.addf %63, %64 : vector<1x128xf32>
    %66 = math.rsqrt %65 : vector<1x128xf32>
    %67 = vector.broadcast %60 : vector<1x128xf32> to vector<16x128xf32>
    %68 = arith.subf %54, %67 : vector<16x128xf32>
    %69 = vector.broadcast %66 : vector<1x128xf32> to vector<16x128xf32>
    %70 = arith.mulf %68, %69 : vector<16x128xf32>
    %71 = arith.addf %70, %1 : vector<16x128xf32>
    %cst_52 = arith.constant 0.000000e+00 : f32
    %72 = vector.broadcast %cst_52 : f32 to vector<16x128xf32>
    %73 = arith.maximumf %71, %72 : vector<16x128xf32>
    %c0_53 = arith.constant 0 : index
    %c0_54 = arith.constant 0 : index
    %c0_55 = arith.constant 0 : index
    %74 = vector.load %arg6[%c0_53, %c0_54, %c0_55] : memref<1x16x128xf32, #tpu.memory_space<vmem>>, vector<1x16x128xf32>
    %75 = vector.shape_cast %74 : vector<1x16x128xf32> to vector<16x128xf32>
    %76 = vector.shape_cast %73 : vector<16x128xf32> to vector<1x16x128xf32>
    tpu.vector_store %arg6[%c0_53, %c0_54, %c0_55], %76 {strides = array<i32>} : memref<1x16x128xf32, #tpu.memory_space<vmem>>, vector<1x16x128xf32>,
    return
  }
  func.func @transform_0(%arg0: i32) -> (i32, i32, i32) {
    %c0_i32 = arith.constant 0 : i32
    %c0_i32_0 = arith.constant 0 : i32
    %c0_i32_1 = arith.constant 0 : i32
    return %arg0, %c0_i32, %c0_i32_0 : i32, i32, i32
  }
  func.func @transform_1(%arg0: i32) -> (i32, i32, i32) {
    %c0_i32 = arith.constant 0 : i32
    %c0_i32_0 = arith.constant 0 : i32
    %c0_i32_1 = arith.constant 0 : i32
    %c0_i32_2 = arith.constant 0 : i32
    return %c0_i32, %c0_i32_0, %c0_i32_1 : i32, i32, i32
  }
  func.func @transform_2(%arg0: i32) -> (i32, i32, i32) {
    %c0_i32 = arith.constant 0 : i32
    %c0_i32_0 = arith.constant 0 : i32
    %c0_i32_1 = arith.constant 0 : i32
    %c0_i32_2 = arith.constant 0 : i32
    return %c0_i32, %c0_i32_0, %c0_i32_1 : i32, i32, i32
  }
  func.func @transform_3(%arg0: i32) -> (i32, i32, i32) {
    %c0_i32 = arith.constant 0 : i32
    %c0_i32_0 = arith.constant 0 : i32
    %c0_i32_1 = arith.constant 0 : i32
    %c0_i32_2 = arith.constant 0 : i32
    return %c0_i32, %c0_i32_0, %c0_i32_1 : i32, i32, i32
  }
  func.func @transform_4(%arg0: i32) -> (i32, i32) {
    %c0_i32 = arith.constant 0 : i32
    %c0_i32_0 = arith.constant 0 : i32
    %c0_i32_1 = arith.constant 0 : i32
    return %c0_i32, %c0_i32_0 : i32, i32
  }
  func.func @transform_5(%arg0: i32) -> (i32, i32, i32) {
    %c0_i32 = arith.constant 0 : i32
    %c0_i32_0 = arith.constant 0 : i32
    %c0_i32_1 = arith.constant 0 : i32
    return %arg0, %c0_i32, %c0_i32_0 : i32, i32, i32
  }
}

</mosaic_0001>

<llo_original>
// kernel: basic_block.1
$region0: #{basic_block.1}
  #allocation0 [shape = 'u32[]', space=smem, size = 0x4, offset = 0x4, fixed_abs, tag = 'smem constant byte address 0x4 - core index']
  #allocation1 [shape = 'u32[144,128]{1,0:T(1,128)}', space=vmem, size = 0x12000, scoped, tag = 'internal scratch']
  %s0 = inlined_call_operand.vmem [shape: f32[1,16,128], index: 0, kind: input, shape index: {}]
  %s1 = inlined_call_operand.vmem [shape: f32[3,128,128], index: 1, kind: input, shape index: {}]
  %s2 = inlined_call_operand.vmem [shape: f32[3,128,128], index: 2, kind: input, shape index: {}]
  %s3 = inlined_call_operand.vmem [shape: f32[2,16,16], index: 3, kind: input, shape index: {}]
  %s4 = inlined_call_operand.vmem [shape: f32[128,128], index: 4, kind: input, shape index: {}]
  %s5 = inlined_call_operand.vmem [shape: f32[1,16,128], index: 5, kind: output, shape index: {}]
  %s6 = sld [smem:[#allocation0]]
  $region30: #{basic_block.1} parent=0
    _
  %s8 = ssub.s32 1, %s6
  %s9 = scalar_select 0, %s8, %s6
  // Predicated region
  $region2: #{basic_block.1} parent=0 // pred_check
    _
  $region3: #{basic_block.1} parent=0 // pred_check_branch
    %11 = sbr.rel (0) target = $region5
  $region4: #{basic_block.1} parent=0 // pred_region
    _
  $region5: #{basic_block.1} parent=0 // pred_fallthru
    _
  // Predicated region
  $region6: #{basic_block.1} parent=0 // pred_check
    _
  $region7: #{basic_block.1} parent=0 // pred_check_branch
    %13 = sbr.rel (0) target = $region9
  $region8: #{basic_block.1} parent=0 // pred_region
    _
  $region9: #{basic_block.1} parent=0 // pred_fallthru
    _
  // Predicated region
  $region10: #{basic_block.1} parent=0 // pred_check
    _
  $region11: #{basic_block.1} parent=0 // pred_check_branch
    %15 = sbr.rel (0) target = $region13
  $region12: #{basic_block.1} parent=0 // pred_region
    _
  $region13: #{basic_block.1} parent=0 // pred_fallthru
    _
  // Predicated region
  $region14: #{basic_block.1} parent=0 // pred_check
    _
  $region15: #{basic_block.1} parent=0 // pred_check_branch
    %17 = sbr.rel (0) target = $region17
  $region16: #{basic_block.1} parent=0 // pred_region
    _
  $region17: #{basic_block.1} parent=0 // pred_fallthru
    _
  // Predicated region
  $region18: #{basic_block.1} parent=0 // pred_check
    _
  $region19: #{basic_block.1} parent=0 // pred_check_branch
    %19 = sbr.rel (0) target = $region21
  $region20: #{basic_block.1} parent=0 // pred_region
    _
  $region21: #{basic_block.1} parent=0 // pred_fallthru
    _
  %v20 = vld [vmem:[%s0] sm:$0xff]
  %v21 = vld [vmem:[%s0 + $0x8] sm:$0xff]
  %v22 = vld [vmem:[%s4] sm:$0xff]
  %v23 = vld [vmem:[%s4 + $0x8] sm:$0xff]
  %v24 = vld [vmem:[%s4 + $0x10] sm:$0xff]
  %v25 = vld [vmem:[%s4 + $0x18] sm:$0xff]
  %v26 = vld [vmem:[%s4 + $0x20] sm:$0xff]
  %v27 = vld [vmem:[%s4 + $0x28] sm:$0xff]
  %v28 = vld [vmem:[%s4 + $0x30] sm:$0xff]
  %v29 = vld [vmem:[%s4 + $0x38] sm:$0xff]
  %v30 = vld [vmem:[%s4 + $0x40] sm:$0xff]
  %v31 = vld [vmem:[%s4 + $0x48] sm:$0xff]
  %v32 = vld [vmem:[%s4 + $0x50] sm:$0xff]
  %v33 = vld [vmem:[%s4 + $0x58] sm:$0xff]
  %v34 = vld [vmem:[%s4 + $0x60] sm:$0xff]
  %v35 = vld [vmem:[%s4 + $0x68] sm:$0xff]
  %v36 = vld [vmem:[%s4 + $0x70] sm:$0xff]
  %v37 = vld [vmem:[%s4 + $0x78] sm:$0xff]
  %v38 = vld [vmem:[%s1] sm:$0xff]
  %v39 = vld [vmem:[%s1 + $0x8] sm:$0xff]
  %v40 = vld [vmem:[%s1 + $0x10] sm:$0xff]
  %v41 = vld [vmem:[%s1 + $0x18] sm:$0xff]
  %v42 = vld [vmem:[%s1 + $0x20] sm:$0xff]
  %v43 = vld [vmem:[%s1 + $0x28] sm:$0xff]
  %v44 = vld [vmem:[%s1 + $0x30] sm:$0xff]
  %v45 = vld [vmem:[%s1 + $0x38] sm:$0xff]
  %v46 = vld [vmem:[%s1 + $0x40] sm:$0xff]
  %v47 = vld [vmem:[%s1 + $0x48] sm:$0xff]
  %v48 = vld [vmem:[%s1 + $0x50] sm:$0xff]
  %v49 = vld [vmem:[%s1 + $0x58] sm:$0xff]
  %v50 = vld [vmem:[%s1 + $0x60] sm:$0xff]
  %v51 = vld [vmem:[%s1 + $0x68] sm:$0xff]
  %v52 = vld [vmem:[%s1 + $0x70] sm:$0xff]
  %v53 = vld [vmem:[%s1 + $0x78] sm:$0xff]
  %54 = vmatprep.subr.mxu0 0.0
  %55 = vmatpush1.msra.mxu0 %v53
  %56 = vmatprep.subr.mxu0 0.0
  %57 = vmatpush1.msra.mxu0 %v52
  %58 = vmatprep.subr.mxu0 0.0
  %59 = vmatpush1.msra.mxu0 %v51
  %60 = vmatprep.subr.mxu0 0.0
  %61 = vmatpush1.msra.mxu0 %v50
  %62 = vmatprep.subr.mxu0 0.0
  %63 = vmatpush1.msra.mxu0 %v49
  %64 = vmatprep.subr.mxu0 0.0
  %65 = vmatpush1.msra.mxu0 %v48
  %66 = vmatprep.subr.mxu0 0.0
  %67 = vmatpush1.msra.mxu0 %v47
  %68 = vmatprep.subr.mxu0 0.0
  %69 = vmatpush1.msra.mxu0 %v46
  %70 = vmatprep.subr.mxu0 0.0
  %71 = vmatpush1.msra.mxu0 %v45
  %72 = vmatprep.subr.mxu0 0.0
  %73 = vmatpush1.msra.mxu0 %v44
  %74 = vmatprep.subr.mxu0 0.0
  %75 = vmatpush1.msra.mxu0 %v43
  %76 = vmatprep.subr.mxu0 0.0
  %77 = vmatpush1.msra.mxu0 %v42
  %78 = vmatprep.subr.mxu0 0.0
  %79 = vmatpush1.msra.mxu0 %v41
  %80 = vmatprep.subr.mxu0 0.0
  %81 = vmatpush1.msra.mxu0 %v40
  %82 = vmatprep.subr.mxu0 0.0
  %83 = vmatpush1.msra.mxu0 %v39
  %84 = vmatprep.subr.mxu0 0.0
  %85 = vmatpush1.msra.mxu0 %v38
  %86 = vmatprep.subr.mxu0 0.0
  %87 = vmatpush2.msra.mxu0 0.0
  %88 = vmatprep.subr.mxu0 0.0
  %89 = vmatpush2.msra.mxu0 0.0
  %90 = vmatprep.subr.mxu0 0.0
  %91 = vmatpush2.msra.mxu0 0.0
  %92 = vmatprep.subr.mxu0 0.0
  %93 = vmatpush2.msra.mxu0 0.0
  %94 = vmatprep.subr.mxu0 0.0
  %95 = vmatpush2.msra.mxu0 0.0
  %96 = vmatprep.subr.mxu0 0.0
  %97 = vmatpush2.msra.mxu0 0.0
  %98 = vmatprep.subr.mxu0 0.0
  %99 = vmatpush2.msra.mxu0 0.0
  %100 = vmatprep.subr.mxu0 0.0
  %101 = vmatpush2.msra.mxu0 0.0
  %102 = vmatprep.subr.mxu0 0.0
  %103 = vmatpush2.msra.mxu0 0.0
  %104 = vmatprep.subr.mxu0 0.0
  %105 = vmatpush2.msra.mxu0 0.0
  %106 = vmatprep.subr.mxu0 0.0
  %107 = vmatpush2.msra.mxu0 0.0
  %108 = vmatprep.subr.mxu0 0.0
  %109 = vmatpush2.msra.mxu0 0.0
  %110 = vmatprep.subr.mxu0 0.0
  %111 = vmatpush2.msra.mxu0 0.0
  %112 = vmatprep.subr.mxu0 0.0
  %113 = vmatpush2.msra.mxu0 0.0
  %114 = vmatprep.subr.mxu0 0.0
  %115 = vmatpush2.msra.mxu0 0.0
  %116 = vmatprep.subr.mxu0 0.0
  %117 = vmatpush2.msra.mxu0 0.0
  %118 = vmatprep.mubr.f32.mxu0 0.0
  %119 = vmatmul.mubr.f32.gmra.mxu0 %v20
  %v120 = vpop.f32.mrf.mxu0
  %v121 = vadd.f32 0.0, %v120
  %v122 = vpop.f32.mrf.mxu0
  %123 = vmatprep.mubr.f32.mxu0 0.0
  %124 = vmatmul.mubr.f32.gmra.mxu0 %v21
  %v125 = vpop.f32.mrf.mxu0
  %v126 = vadd.f32 0.0, %v125
  %v127 = vpop.f32.mrf.mxu0
  %128 = vdwg.mxu0
  %s129 = scalar_lea.vmem %s1, 128
  %v130 = vld [vmem:[%s129] sm:$0xff]
  %v131 = vld [vmem:[%s129 + $0x8] sm:$0xff]
  %v132 = vld [vmem:[%s129 + $0x10] sm:$0xff]
  %v133 = vld [vmem:[%s129 + $0x18] sm:$0xff]
  %v134 = vld [vmem:[%s129 + $0x20] sm:$0xff]
  %v135 = vld [vmem:[%s129 + $0x28] sm:$0xff]
  %v136 = vld [vmem:[%s129 + $0x30] sm:$0xff]
  %v137 = vld [vmem:[%s129 + $0x38] sm:$0xff]
  %v138 = vld [vmem:[%s129 + $0x40] sm:$0xff]
  %v139 = vld [vmem:[%s129 + $0x48] sm:$0xff]
  %v140 = vld [vmem:[%s129 + $0x50] sm:$0xff]
  %v141 = vld [vmem:[%s129 + $0x58] sm:$0xff]
  %v142 = vld [vmem:[%s129 + $0x60] sm:$0xff]
  %v143 = vld [vmem:[%s129 + $0x68] sm:$0xff]
  %v144 = vld [vmem:[%s129 + $0x70] sm:$0xff]
  %v145 = vld [vmem:[%s129 + $0x78] sm:$0xff]
  %s146 = scalar_lea.vmem %s1, 256
  %v147 = vld [vmem:[%s146] sm:$0xff]
  %v148 = vld [vmem:[%s146 + $0x8] sm:$0xff]
  %v149 = vld [vmem:[%s146 + $0x10] sm:$0xff]
  %v150 = vld [vmem:[%s146 + $0x18] sm:$0xff]
  %v151 = vld [vmem:[%s146 + $0x20] sm:$0xff]
  %v152 = vld [vmem:[%s146 + $0x28] sm:$0xff]
  %v153 = vld [vmem:[%s146 + $0x30] sm:$0xff]
  %v154 = vld [vmem:[%s146 + $0x38] sm:$0xff]
  %v155 = vld [vmem:[%s146 + $0x40] sm:$0xff]
  %v156 = vld [vmem:[%s146 + $0x48] sm:$0xff]
  %v157 = vld [vmem:[%s146 + $0x50] sm:$0xff]
  %v158 = vld [vmem:[%s146 + $0x58] sm:$0xff]
  %v159 = vld [vmem:[%s146 + $0x60] sm:$0xff]
  %v160 = vld [vmem:[%s146 + $0x68] sm:$0xff]
  %v161 = vld [vmem:[%s146 + $0x70] sm:$0xff]
  %v162 = vld [vmem:[%s146 + $0x78] sm:$0xff]
  %163 = vmatprep.subr.mxu0 0.0
  %164 = vmatpush1.msra.mxu0 %v162
  %165 = vmatprep.subr.mxu0 0.0
  %166 = vmatpush1.msra.mxu0 %v161
  %167 = vmatprep.subr.mxu0 0.0
  %168 = vmatpush1.msra.mxu0 %v160
  %169 = vmatprep.subr.mxu0 0.0
  %170 = vmatpush1.msra.mxu0 %v159
  %171 = vmatprep.subr.mxu0 0.0
  %172 = vmatpush1.msra.mxu0 %v158
  %173 = vmatprep.subr.mxu0 0.0
  %174 = vmatpush1.msra.mxu0 %v157
  %175 = vmatprep.subr.mxu0 0.0
  %176 = vmatpush1.msra.mxu0 %v156
  %177 = vmatprep.subr.mxu0 0.0
  %178 = vmatpush1.msra.mxu0 %v155
  %179 = vmatprep.subr.mxu0 0.0
  %180 = vmatpush1.msra.mxu0 %v154
  %181 = vmatprep.subr.mxu0 0.0
  %182 = vmatpush1.msra.mxu0 %v153
  %183 = vmatprep.subr.mxu0 0.0
  %184 = vmatpush1.msra.mxu0 %v152
  %185 = vmatprep.subr.mxu0 0.0
  %186 = vmatpush1.msra.mxu0 %v151
  %187 = vmatprep.subr.mxu0 0.0
  %188 = vmatpush1.msra.mxu0 %v150
  %189 = vmatprep.subr.mxu0 0.0
  %190 = vmatpush1.msra.mxu0 %v149
  %191 = vmatprep.subr.mxu0 0.0
  %192 = vmatpush1.msra.mxu0 %v148
  %193 = vmatprep.subr.mxu0 0.0
  %194 = vmatpush1.msra.mxu0 %v147
  %195 = vmatprep.subr.mxu0 0.0
  %196 = vmatpush2.msra.mxu0 0.0
  %197 = vmatprep.subr.mxu0 0.0
  %198 = vmatpush2.msra.mxu0 0.0
  %199 = vmatprep.subr.mxu0 0.0
  %200 = vmatpush2.msra.mxu0 0.0
  %201 = vmatprep.subr.mxu0 0.0
  %202 = vmatpush2.msra.mxu0 0.0
  %203 = vmatprep.subr.mxu0 0.0
  %204 = vmatpush2.msra.mxu0 0.0
  %205 = vmatprep.subr.mxu0 0.0
  %206 = vmatpush2.msra.mxu0 0.0
  %207 = vmatprep.subr.mxu0 0.0
  %208 = vmatpush2.msra.mxu0 0.0
  %209 = vmatprep.subr.mxu0 0.0
  %210 = vmatpush2.msra.mxu0 0.0
  %211 = vmatprep.subr.mxu0 0.0
  %212 = vmatpush2.msra.mxu0 0.0
  %213 = vmatprep.subr.mxu0 0.0
  %214 = vmatpush2.msra.mxu0 0.0
  %215 = vmatprep.subr.mxu0 0.0
  %216 = vmatpush2.msra.mxu0 0.0
  %217 = vmatprep.subr.mxu0 0.0
  %218 = vmatpush2.msra.mxu0 0.0
  %219 = vmatprep.subr.mxu0 0.0
  %220 = vmatpush2.msra.mxu0 0.0
  %221 = vmatprep.subr.mxu0 0.0
  %222 = vmatpush2.msra.mxu0 0.0
  %223 = vmatprep.subr.mxu0 0.0
  %224 = vmatpush2.msra.mxu0 0.0
  %225 = vmatprep.subr.mxu0 0.0
  %226 = vmatpush2.msra.mxu0 0.0
  %227 = vmatprep.mubr.f32.mxu0 0.0
  %228 = vmatmul.mubr.f32.gmra.mxu0 %v20
  %v229 = vpop.f32.mrf.mxu0
  %v230 = vadd.f32 0.0, %v229
  %v231 = vpop.f32.mrf.mxu0
  %232 = vmatprep.mubr.f32.mxu0 0.0
  %233 = vmatmul.mubr.f32.gmra.mxu0 %v21
  %v234 = vpop.f32.mrf.mxu0
  %v235 = vadd.f32 0.0, %v234
  %v236 = vpop.f32.mrf.mxu0
  %237 = vdwg.mxu0
  %v238 = vld [vmem:[%s3] sm:$0xff]
  %v239 = vld [vmem:[%s3 + $0x8] sm:$0xff]
  %vm240 = vcmask 130048
  %v242 = vsel %vm240, %v238, 0
  %v245 = vsel %vm240, %v239, 0
  %247 = vmatprep.subr.mxu0 0.0
  %248 = vmatpush1.msra.mxu0 0.0
  %249 = vmatprep.subr.mxu0 0.0
  %250 = vmatpush1.msra.mxu0 0.0
  %251 = vmatprep.subr.mxu0 0.0
  %252 = vmatpush1.msra.mxu0 0.0
  %253 = vmatprep.subr.mxu0 0.0
  %254 = vmatpush1.msra.mxu0 0.0
  %255 = vmatprep.subr.mxu0 0.0
  %256 = vmatpush1.msra.mxu0 0.0
  %257 = vmatprep.subr.mxu0 0.0
  %258 = vmatpush1.msra.mxu0 0.0
  %259 = vmatprep.subr.mxu0 0.0
  %260 = vmatpush1.msra.mxu0 0.0
  %261 = vmatprep.subr.mxu0 0.0
  %262 = vmatpush1.msra.mxu0 0.0
  %263 = vmatprep.subr.mxu0 0.0
  %264 = vmatpush1.msra.mxu0 0.0
  %265 = vmatprep.subr.mxu0 0.0
  %266 = vmatpush1.msra.mxu0 0.0
  %267 = vmatprep.subr.mxu0 0.0
  %268 = vmatpush1.msra.mxu0 0.0
  %269 = vmatprep.subr.mxu0 0.0
  %270 = vmatpush1.msra.mxu0 0.0
  %271 = vmatprep.subr.mxu0 0.0
  %272 = vmatpush1.msra.mxu0 0.0
  %273 = vmatprep.subr.mxu0 0.0
  %274 = vmatpush1.msra.mxu0 0.0
  %275 = vmatprep.subr.mxu0 0.0
  %276 = vmatpush1.msra.mxu0 %v126
  %277 = vmatprep.subr.mxu0 0.0
  %278 = vmatpush1.msra.mxu0 %v121
  %279 = vmatprep.subr.mxu0 0.0
  %280 = vmatpush2.msra.mxu0 0.0
  %281 = vmatprep.subr.mxu0 0.0
  %282 = vmatpush2.msra.mxu0 0.0
  %283 = vmatprep.subr.mxu0 0.0
  %284 = vmatpush2.msra.mxu0 0.0
  %285 = vmatprep.subr.mxu0 0.0
  %286 = vmatpush2.msra.mxu0 0.0
  %287 = vmatprep.subr.mxu0 0.0
  %288 = vmatpush2.msra.mxu0 0.0
  %289 = vmatprep.subr.mxu0 0.0
  %290 = vmatpush2.msra.mxu0 0.0
  %291 = vmatprep.subr.mxu0 0.0
  %292 = vmatpush2.msra.mxu0 0.0
  %293 = vmatprep.subr.mxu0 0.0
  %294 = vmatpush2.msra.mxu0 0.0
  %295 = vmatprep.subr.mxu0 0.0
  %296 = vmatpush2.msra.mxu0 0.0
  %297 = vmatprep.subr.mxu0 0.0
  %298 = vmatpush2.msra.mxu0 0.0
  %299 = vmatprep.subr.mxu0 0.0
  %300 = vmatpush2.msra.mxu0 0.0
  %301 = vmatprep.subr.mxu0 0.0
  %302 = vmatpush2.msra.mxu0 0.0
  %303 = vmatprep.subr.mxu0 0.0
  %304 = vmatpush2.msra.mxu0 0.0
  %305 = vmatprep.subr.mxu0 0.0
  %306 = vmatpush2.msra.mxu0 0.0
  %307 = vmatprep.subr.mxu0 0.0
  %308 = vmatpush2.msra.mxu0 0.0
  %309 = vmatprep.subr.mxu0 0.0
  %310 = vmatpush2.msra.mxu0 0.0
  %311 = vmatprep.mubr.f32.mxu0 0.0
  %312 = vmatmul.mubr.f32.gmra.mxu0 %v242
  %v313 = vpop.f32.mrf.mxu0
  %v314 = vadd.f32 0.0, %v313
  %v315 = vpop.f32.mrf.mxu0
  %316 = vmatprep.mubr.f32.mxu0 0.0
  %317 = vmatmul.mubr.f32.gmra.mxu0 %v245
  %v318 = vpop.f32.mrf.mxu0
  %v319 = vadd.f32 0.0, %v318
  %v320 = vpop.f32.mrf.mxu0
  %321 = vdwg.mxu0
  %s322 = scalar_lea.vmem %s3, 16
  %v323 = vld [vmem:[%s322] sm:$0xff]
  %v324 = vld [vmem:[%s322 + $0x8] sm:$0xff]
  %v326 = vsel %vm240, %v323, 0
  %v329 = vsel %vm240, %v324, 0
  %331 = vmatprep.subr.mxu0 0.0
  %332 = vmatpush1.msra.mxu0 0.0
  %333 = vmatprep.subr.mxu0 0.0
  %334 = vmatpush1.msra.mxu0 0.0
  %335 = vmatprep.subr.mxu0 0.0
  %336 = vmatpush1.msra.mxu0 0.0
  %337 = vmatprep.subr.mxu0 0.0
  %338 = vmatpush1.msra.mxu0 0.0
  %339 = vmatprep.subr.mxu0 0.0
  %340 = vmatpush1.msra.mxu0 0.0
  %341 = vmatprep.subr.mxu0 0.0
  %342 = vmatpush1.msra.mxu0 0.0
  %343 = vmatprep.subr.mxu0 0.0
  %344 = vmatpush1.msra.mxu0 0.0
  %345 = vmatprep.subr.mxu0 0.0
  %346 = vmatpush1.msra.mxu0 0.0
  %347 = vmatprep.subr.mxu0 0.0
  %348 = vmatpush1.msra.mxu0 0.0
  %349 = vmatprep.subr.mxu0 0.0
  %350 = vmatpush1.msra.mxu0 0.0
  %351 = vmatprep.subr.mxu0 0.0
  %352 = vmatpush1.msra.mxu0 0.0
  %353 = vmatprep.subr.mxu0 0.0
  %354 = vmatpush1.msra.mxu0 0.0
  %355 = vmatprep.subr.mxu0 0.0
  %356 = vmatpush1.msra.mxu0 0.0
  %357 = vmatprep.subr.mxu0 0.0
  %358 = vmatpush1.msra.mxu0 0.0
  %359 = vmatprep.subr.mxu0 0.0
  %360 = vmatpush1.msra.mxu0 %v235
  %361 = vmatprep.subr.mxu0 0.0
  %362 = vmatpush1.msra.mxu0 %v230
  %363 = vmatprep.subr.mxu0 0.0
  %364 = vmatpush2.msra.mxu0 0.0
  %365 = vmatprep.subr.mxu0 0.0
  %366 = vmatpush2.msra.mxu0 0.0
  %367 = vmatprep.subr.mxu0 0.0
  %368 = vmatpush2.msra.mxu0 0.0
  %369 = vmatprep.subr.mxu0 0.0
  %370 = vmatpush2.msra.mxu0 0.0
  %371 = vmatprep.subr.mxu0 0.0
  %372 = vmatpush2.msra.mxu0 0.0
  %373 = vmatprep.subr.mxu0 0.0
  %374 = vmatpush2.msra.mxu0 0.0
  %375 = vmatprep.subr.mxu0 0.0
  %376 = vmatpush2.msra.mxu0 0.0
  %377 = vmatprep.subr.mxu0 0.0
  %378 = vmatpush2.msra.mxu0 0.0
  %379 = vmatprep.subr.mxu0 0.0
  %380 = vmatpush2.msra.mxu0 0.0
  %381 = vmatprep.subr.mxu0 0.0
  %382 = vmatpush2.msra.mxu0 0.0
  %383 = vmatprep.subr.mxu0 0.0
  %384 = vmatpush2.msra.mxu0 0.0
  %385 = vmatprep.subr.mxu0 0.0
  %386 = vmatpush2.msra.mxu0 0.0
  %387 = vmatprep.subr.mxu0 0.0
  %388 = vmatpush2.msra.mxu0 0.0
  %389 = vmatprep.subr.mxu0 0.0
  %390 = vmatpush2.msra.mxu0 0.0
  %391 = vmatprep.subr.mxu0 0.0
  %392 = vmatpush2.msra.mxu0 0.0
  %393 = vmatprep.subr.mxu0 0.0
  %394 = vmatpush2.msra.mxu0 0.0
  %395 = vmatprep.mubr.f32.mxu0 0.0
  %396 = vmatmul.mubr.f32.gmra.mxu0 %v326
  %v397 = vpop.f32.mrf.mxu0
  %v398 = vadd.f32 0.0, %v397
  %v399 = vpop.f32.mrf.mxu0
  %400 = vmatprep.mubr.f32.mxu0 0.0
  %401 = vmatmul.mubr.f32.gmra.mxu0 %v329
  %v402 = vpop.f32.mrf.mxu0
  %v403 = vadd.f32 0.0, %v402
  %v404 = vpop.f32.mrf.mxu0
  %405 = vdwg.mxu0
  %406 = vmatprep.subr.mxu0 0.0
  %407 = vmatpush1.msra.mxu0 %v145
  %408 = vmatprep.subr.mxu0 0.0
  %409 = vmatpush1.msra.mxu0 %v144
  %410 = vmatprep.subr.mxu0 0.0
  %411 = vmatpush1.msra.mxu0 %v143
  %412 = vmatprep.subr.mxu0 0.0
  %413 = vmatpush1.msra.mxu0 %v142
  %414 = vmatprep.subr.mxu0 0.0
  %415 = vmatpush1.msra.mxu0 %v141
  %416 = vmatprep.subr.mxu0 0.0
  %417 = vmatpush1.msra.mxu0 %v140
  %418 = vmatprep.subr.mxu0 0.0
  %419 = vmatpush1.msra.mxu0 %v139
  %420 = vmatprep.subr.mxu0 0.0
  %421 = vmatpush1.msra.mxu0 %v138
  %422 = vmatprep.subr.mxu0 0.0
  %423 = vmatpush1.msra.mxu0 %v137
  %424 = vmatprep.subr.mxu0 0.0
  %425 = vmatpush1.msra.mxu0 %v136
  %426 = vmatprep.subr.mxu0 0.0
  %427 = vmatpush1.msra.mxu0 %v135
  %428 = vmatprep.subr.mxu0 0.0
  %429 = vmatpush1.msra.mxu0 %v134
  %430 = vmatprep.subr.mxu0 0.0
  %431 = vmatpush1.msra.mxu0 %v133
  %432 = vmatprep.subr.mxu0 0.0
  %433 = vmatpush1.msra.mxu0 %v132
  %434 = vmatprep.subr.mxu0 0.0
  %435 = vmatpush1.msra.mxu0 %v131
  %436 = vmatprep.subr.mxu0 0.0
  %437 = vmatpush1.msra.mxu0 %v130
  %438 = vmatprep.subr.mxu0 0.0
  %439 = vmatpush2.msra.mxu0 0.0
  %440 = vmatprep.subr.mxu0 0.0
  %441 = vmatpush2.msra.mxu0 0.0
  %442 = vmatprep.subr.mxu0 0.0
  %443 = vmatpush2.msra.mxu0 0.0
  %444 = vmatprep.subr.mxu0 0.0
  %445 = vmatpush2.msra.mxu0 0.0
  %446 = vmatprep.subr.mxu0 0.0
  %447 = vmatpush2.msra.mxu0 0.0
  %448 = vmatprep.subr.mxu0 0.0
  %449 = vmatpush2.msra.mxu0 0.0
  %450 = vmatprep.subr.mxu0 0.0
  %451 = vmatpush2.msra.mxu0 0.0
  %452 = vmatprep.subr.mxu0 0.0
  %453 = vmatpush2.msra.mxu0 0.0
  %454 = vmatprep.subr.mxu0 0.0
  %455 = vmatpush2.msra.mxu0 0.0
  %456 = vmatprep.subr.mxu0 0.0
  %457 = vmatpush2.msra.mxu0 0.0
  %458 = vmatprep.subr.mxu0 0.0
  %459 = vmatpush2.msra.mxu0 0.0
  %460 = vmatprep.subr.mxu0 0.0
  %461 = vmatpush2.msra.mxu0 0.0
  %462 = vmatprep.subr.mxu0 0.0
  %463 = vmatpush2.msra.mxu0 0.0
  %464 = vmatprep.subr.mxu0 0.0
  %465 = vmatpush2.msra.mxu0 0.0
  %466 = vmatprep.subr.mxu0 0.0
  %467 = vmatpush2.msra.mxu0 0.0
  %468 = vmatprep.subr.mxu0 0.0
  %469 = vmatpush2.msra.mxu0 0.0
  %470 = vmatprep.mubr.f32.mxu0 0.0
  %471 = vmatmul.mubr.f32.gmra.mxu0 %v20
  %v472 = vpop.f32.mrf.mxu0
  %v473 = vadd.f32 %v314, %v472
  %v474 = vpop.f32.mrf.mxu0
  %475 = vmatprep.mubr.f32.mxu0 0.0
  %476 = vmatmul.mubr.f32.gmra.mxu0 %v21
  %v477 = vpop.f32.mrf.mxu0
  %v478 = vadd.f32 %v319, %v477
  %v479 = vpop.f32.mrf.mxu0
  %480 = vdwg.mxu0
  %v481 = vadd.f32 %v473, %v398
  %v482 = vadd.f32 %v478, %v403
  %v483 = vadd.f32 %v481, %v482
  %v484 = vrot.slane %v483, 4
  %v485 = vadd.f32 %v483, %v484
  %v486 = vrot.slane %v485, 2
  %v487 = vadd.f32 %v485, %v486
  %v488 = vrot.slane %v487, 1
  %v489 = vadd.f32 %v487, %v488
  %v490 = vmul.f32 %v481, %v481
  %v491 = vmul.f32 %v482, %v482
  %v492 = vadd.f32 %v490, %v491
  %v493 = vrot.slane %v492, 4
  %v494 = vadd.f32 %v492, %v493
  %v495 = vrot.slane %v494, 2
  %v496 = vadd.f32 %v494, %v495
  %v497 = vrot.slane %v496, 1
  %v498 = vadd.f32 %v496, %v497
  %499 = vmatprep.subr.mxu0 0.0
  %500 = vmatpush1.msra.mxu0 %v37
  %501 = vmatprep.subr.mxu0 0.0
  %502 = vmatpush1.msra.mxu0 %v36
  %503 = vmatprep.subr.mxu0 0.0
  %504 = vmatpush1.msra.mxu0 %v35
  %505 = vmatprep.subr.mxu0 0.0
  %506 = vmatpush1.msra.mxu0 %v34
  %507 = vmatprep.subr.mxu0 0.0
  %508 = vmatpush1.msra.mxu0 %v33
  %509 = vmatprep.subr.mxu0 0.0
  %510 = vmatpush1.msra.mxu0 %v32
  %511 = vmatprep.subr.mxu0 0.0
  %512 = vmatpush1.msra.mxu0 %v31
  %513 = vmatprep.subr.mxu0 0.0
  %514 = vmatpush1.msra.mxu0 %v30
  %515 = vmatprep.subr.mxu0 0.0
  %516 = vmatpush1.msra.mxu0 %v29
  %517 = vmatprep.subr.mxu0 0.0
  %518 = vmatpush1.msra.mxu0 %v28
  %519 = vmatprep.subr.mxu0 0.0
  %520 = vmatpush1.msra.mxu0 %v27
  %521 = vmatprep.subr.mxu0 0.0
  %522 = vmatpush1.msra.mxu0 %v26
  %523 = vmatprep.subr.mxu0 0.0
  %524 = vmatpush1.msra.mxu0 %v25
  %525 = vmatprep.subr.mxu0 0.0
  %526 = vmatpush1.msra.mxu0 %v24
  %527 = vmatprep.subr.mxu0 0.0
  %528 = vmatpush1.msra.mxu0 %v23
  %529 = vmatprep.subr.mxu0 0.0
  %530 = vmatpush1.msra.mxu0 %v22
  %531 = vmatprep.subr.mxu0 0.0
  %532 = vmatpush2.msra.mxu0 0.0
  %533 = vmatprep.subr.mxu0 0.0
  %534 = vmatpush2.msra.mxu0 0.0
  %535 = vmatprep.subr.mxu0 0.0
  %536 = vmatpush2.msra.mxu0 0.0
  %537 = vmatprep.subr.mxu0 0.0
  %538 = vmatpush2.msra.mxu0 0.0
  %539 = vmatprep.subr.mxu0 0.0
  %540 = vmatpush2.msra.mxu0 0.0
  %541 = vmatprep.subr.mxu0 0.0
  %542 = vmatpush2.msra.mxu0 0.0
  %543 = vmatprep.subr.mxu0 0.0
  %544 = vmatpush2.msra.mxu0 0.0
  %545 = vmatprep.subr.mxu0 0.0
  %546 = vmatpush2.msra.mxu0 0.0
  %547 = vmatprep.subr.mxu0 0.0
  %548 = vmatpush2.msra.mxu0 0.0
  %549 = vmatprep.subr.mxu0 0.0
  %550 = vmatpush2.msra.mxu0 0.0
  %551 = vmatprep.subr.mxu0 0.0
  %552 = vmatpush2.msra.mxu0 0.0
  %553 = vmatprep.subr.mxu0 0.0
  %554 = vmatpush2.msra.mxu0 0.0
  %555 = vmatprep.subr.mxu0 0.0
  %556 = vmatpush2.msra.mxu0 0.0
  %557 = vmatprep.subr.mxu0 0.0
  %558 = vmatpush2.msra.mxu0 0.0
  %559 = vmatprep.subr.mxu0 0.0
  %560 = vmatpush2.msra.mxu0 0.0
  %561 = vmatprep.subr.mxu0 0.0
  %562 = vmatpush2.msra.mxu0 0.0
  %563 = vmatprep.mubr.f32.mxu0 0.0
  %564 = vmatmul.mubr.f32.gmra.mxu0 %v489
  %v565 = vpop.f32.mrf.mxu0
  %v566 = vadd.f32 0.0, %v565
  %v567 = vpop.f32.mrf.mxu0
  %568 = vdwg.mxu0
  %569 = vmatprep.subr.mxu0 0.0
  %570 = vmatpush1.msra.mxu0 %v37
  %571 = vmatprep.subr.mxu0 0.0
  %572 = vmatpush1.msra.mxu0 %v36
  %573 = vmatprep.subr.mxu0 0.0
  %574 = vmatpush1.msra.mxu0 %v35
  %575 = vmatprep.subr.mxu0 0.0
  %576 = vmatpush1.msra.mxu0 %v34
  %577 = vmatprep.subr.mxu0 0.0
  %578 = vmatpush1.msra.mxu0 %v33
  %579 = vmatprep.subr.mxu0 0.0
  %580 = vmatpush1.msra.mxu0 %v32
  %581 = vmatprep.subr.mxu0 0.0
  %582 = vmatpush1.msra.mxu0 %v31
  %583 = vmatprep.subr.mxu0 0.0
  %584 = vmatpush1.msra.mxu0 %v30
  %585 = vmatprep.subr.mxu0 0.0
  %586 = vmatpush1.msra.mxu0 %v29
  %587 = vmatprep.subr.mxu0 0.0
  %588 = vmatpush1.msra.mxu0 %v28
  %589 = vmatprep.subr.mxu0 0.0
  %590 = vmatpush1.msra.mxu0 %v27
  %591 = vmatprep.subr.mxu0 0.0
  %592 = vmatpush1.msra.mxu0 %v26
  %593 = vmatprep.subr.mxu0 0.0
  %594 = vmatpush1.msra.mxu0 %v25
  %595 = vmatprep.subr.mxu0 0.0
  %596 = vmatpush1.msra.mxu0 %v24
  %597 = vmatprep.subr.mxu0 0.0
  %598 = vmatpush1.msra.mxu0 %v23
  %599 = vmatprep.subr.mxu0 0.0
  %600 = vmatpush1.msra.mxu0 %v22
  %601 = vmatprep.subr.mxu0 0.0
  %602 = vmatpush2.msra.mxu0 0.0
  %603 = vmatprep.subr.mxu0 0.0
  %604 = vmatpush2.msra.mxu0 0.0
  %605 = vmatprep.subr.mxu0 0.0
  %606 = vmatpush2.msra.mxu0 0.0
  %607 = vmatprep.subr.mxu0 0.0
  %608 = vmatpush2.msra.mxu0 0.0
  %609 = vmatprep.subr.mxu0 0.0
  %610 = vmatpush2.msra.mxu0 0.0
  %611 = vmatprep.subr.mxu0 0.0
  %612 = vmatpush2.msra.mxu0 0.0
  %613 = vmatprep.subr.mxu0 0.0
  %614 = vmatpush2.msra.mxu0 0.0
  %615 = vmatprep.subr.mxu0 0.0
  %616 = vmatpush2.msra.mxu0 0.0
  %617 = vmatprep.subr.mxu0 0.0
  %618 = vmatpush2.msra.mxu0 0.0
  %619 = vmatprep.subr.mxu0 0.0
  %620 = vmatpush2.msra.mxu0 0.0
  %621 = vmatprep.subr.mxu0 0.0
  %622 = vmatpush2.msra.mxu0 0.0
  %623 = vmatprep.subr.mxu0 0.0
  %624 = vmatpush2.msra.mxu0 0.0
  %625 = vmatprep.subr.mxu0 0.0
  %626 = vmatpush2.msra.mxu0 0.0
  %627 = vmatprep.subr.mxu0 0.0
  %628 = vmatpush2.msra.mxu0 0.0
  %629 = vmatprep.subr.mxu0 0.0
  %630 = vmatpush2.msra.mxu0 0.0
  %631 = vmatprep.subr.mxu0 0.0
  %632 = vmatpush2.msra.mxu0 0.0
  %633 = vmatprep.mubr.f32.mxu0 0.0
  %634 = vmatmul.mubr.f32.gmra.mxu0 %v498
  %v635 = vpop.f32.mrf.mxu0
  %v636 = vadd.f32 0.0, %v635
  %v637 = vpop.f32.mrf.mxu0
  %638 = vdwg.mxu0
  %v639 = vmul.f32 %v566, %v566
  %v640 = vsub.f32 %v636, %v639
  %v641 = vadd.f32 %v640, 1e-05
  %v642 = vrsqrt.pop %v641
  %v643 = vlaneseq
  %v644 = vshrl.u32 %v643, 7
  %v645 = vsub.s32 0, %v644
  %v646 = vrot.slane %v566, %v645
  %v647 = vsub.f32 %v481, %v646
  %v648 = vsub.f32 %v482, %v646
  %v649 = vlaneseq
  %v650 = vshrl.u32 %v649, 7
  %v651 = vsub.s32 0, %v650
  %v652 = vrot.slane %v642, %v651
  %v653 = vmul.f32 %v647, %v652
  %v654 = vmul.f32 %v648, %v652
  %v655 = vmax.f32 %v653, 0.0
  %v656 = vmax.f32 %v654, 0.0
  %v657 = vld [vmem:[%s2] sm:$0xff]
  %v658 = vld [vmem:[%s2 + $0x8] sm:$0xff]
  %v659 = vld [vmem:[%s2 + $0x10] sm:$0xff]
  %v660 = vld [vmem:[%s2 + $0x18] sm:$0xff]
  %v661 = vld [vmem:[%s2 + $0x20] sm:$0xff]
  %v662 = vld [vmem:[%s2 + $0x28] sm:$0xff]
  %v663 = vld [vmem:[%s2 + $0x30] sm:$0xff]
  %v664 = vld [vmem:[%s2 + $0x38] sm:$0xff]
  %v665 = vld [vmem:[%s2 + $0x40] sm:$0xff]
  %v666 = vld [vmem:[%s2 + $0x48] sm:$0xff]
  %v667 = vld [vmem:[%s2 + $0x50] sm:$0xff]
  %v668 = vld [vmem:[%s2 + $0x58] sm:$0xff]
  %v669 = vld [vmem:[%s2 + $0x60] sm:$0xff]
  %v670 = vld [vmem:[%s2 + $0x68] sm:$0xff]
  %v671 = vld [vmem:[%s2 + $0x70] sm:$0xff]
  %v672 = vld [vmem:[%s2 + $0x78] sm:$0xff]
  %673 = vmatprep.subr.mxu0 0.0
  %674 = vmatpush1.msra.mxu0 %v672
  %675 = vmatprep.subr.mxu0 0.0
  %676 = vmatpush1.msra.mxu0 %v671
  %677 = vmatprep.subr.mxu0 0.0
  %678 = vmatpush1.msra.mxu0 %v670
  %679 = vmatprep.subr.mxu0 0.0
  %680 = vmatpush1.msra.mxu0 %v669
  %681 = vmatprep.subr.mxu0 0.0
  %682 = vmatpush1.msra.mxu0 %v668
  %683 = vmatprep.subr.mxu0 0.0
  %684 = vmatpush1.msra.mxu0 %v667
  %685 = vmatprep.subr.mxu0 0.0
  %686 = vmatpush1.msra.mxu0 %v666
  %687 = vmatprep.subr.mxu0 0.0
  %688 = vmatpush1.msra.mxu0 %v665
  %689 = vmatprep.subr.mxu0 0.0
  %690 = vmatpush1.msra.mxu0 %v664
  %691 = vmatprep.subr.mxu0 0.0
  %692 = vmatpush1.msra.mxu0 %v663
  %693 = vmatprep.subr.mxu0 0.0
  %694 = vmatpush1.msra.mxu0 %v662
  %695 = vmatprep.subr.mxu0 0.0
  %696 = vmatpush1.msra.mxu0 %v661
  %697 = vmatprep.subr.mxu0 0.0
  %698 = vmatpush1.msra.mxu0 %v660
  %699 = vmatprep.subr.mxu0 0.0
  %700 = vmatpush1.msra.mxu0 %v659
  %701 = vmatprep.subr.mxu0 0.0
  %702 = vmatpush1.msra.mxu0 %v658
  %703 = vmatprep.subr.mxu0 0.0
  %704 = vmatpush1.msra.mxu0 %v657
  %705 = vmatprep.subr.mxu0 0.0
  %706 = vmatpush2.msra.mxu0 0.0
  %707 = vmatprep.subr.mxu0 0.0
  %708 = vmatpush2.msra.mxu0 0.0
  %709 = vmatprep.subr.mxu0 0.0
  %710 = vmatpush2.msra.mxu0 0.0
  %711 = vmatprep.subr.mxu0 0.0
  %712 = vmatpush2.msra.mxu0 0.0
  %713 = vmatprep.subr.mxu0 0.0
  %714 = vmatpush2.msra.mxu0 0.0
  %715 = vmatprep.subr.mxu0 0.0
  %716 = vmatpush2.msra.mxu0 0.0
  %717 = vmatprep.subr.mxu0 0.0
  %718 = vmatpush2.msra.mxu0 0.0
  %719 = vmatprep.subr.mxu0 0.0
  %720 = vmatpush2.msra.mxu0 0.0
  %721 = vmatprep.subr.mxu0 0.0
  %722 = vmatpush2.msra.mxu0 0.0
  %723 = vmatprep.subr.mxu0 0.0
  %724 = vmatpush2.msra.mxu0 0.0
  %725 = vmatprep.subr.mxu0 0.0
  %726 = vmatpush2.msra.mxu0 0.0
  %727 = vmatprep.subr.mxu0 0.0
  %728 = vmatpush2.msra.mxu0 0.0
  %729 = vmatprep.subr.mxu0 0.0
  %730 = vmatpush2.msra.mxu0 0.0
  %731 = vmatprep.subr.mxu0 0.0
  %732 = vmatpush2.msra.mxu0 0.0
  %733 = vmatprep.subr.mxu0 0.0
  %734 = vmatpush2.msra.mxu0 0.0
  %735 = vmatprep.subr.mxu0 0.0
  %736 = vmatpush2.msra.mxu0 0.0
  %737 = vmatprep.mubr.f32.mxu0 0.0
  %738 = vmatmul.mubr.f32.gmra.mxu0 %v655
  %v739 = vpop.f32.mrf.mxu0
  %v740 = vadd.f32 0.0, %v739
  %v741 = vpop.f32.mrf.mxu0
  %742 = vmatprep.mubr.f32.mxu0 0.0
  %743 = vmatmul.mubr.f32.gmra.mxu0 %v656
  %v744 = vpop.f32.mrf.mxu0
  %v745 = vadd.f32 0.0, %v744
  %v746 = vpop.f32.mrf.mxu0
  %747 = vdwg.mxu0
  %s748 = scalar_lea.vmem %s2, 128
  %v749 = vld [vmem:[%s748] sm:$0xff]
  %v750 = vld [vmem:[%s748 + $0x8] sm:$0xff]
  %v751 = vld [vmem:[%s748 + $0x10] sm:$0xff]
  %v752 = vld [vmem:[%s748 + $0x18] sm:$0xff]
  %v753 = vld [vmem:[%s748 + $0x20] sm:$0xff]
  %v754 = vld [vmem:[%s748 + $0x28] sm:$0xff]
  %v755 = vld [vmem:[%s748 + $0x30] sm:$0xff]
  %v756 = vld [vmem:[%s748 + $0x38] sm:$0xff]
  %v757 = vld [vmem:[%s748 + $0x40] sm:$0xff]
  %v758 = vld [vmem:[%s748 + $0x48] sm:$0xff]
  %v759 = vld [vmem:[%s748 + $0x50] sm:$0xff]
  %v760 = vld [vmem:[%s748 + $0x58] sm:$0xff]
  %v761 = vld [vmem:[%s748 + $0x60] sm:$0xff]
  %v762 = vld [vmem:[%s748 + $0x68] sm:$0xff]
  %v763 = vld [vmem:[%s748 + $0x70] sm:$0xff]
  %v764 = vld [vmem:[%s748 + $0x78] sm:$0xff]
  %s765 = scalar_lea.vmem %s2, 256
  %v766 = vld [vmem:[%s765] sm:$0xff]
  %v767 = vld [vmem:[%s765 + $0x8] sm:$0xff]
  %v768 = vld [vmem:[%s765 + $0x10] sm:$0xff]
  %v769 = vld [vmem:[%s765 + $0x18] sm:$0xff]
  %v770 = vld [vmem:[%s765 + $0x20] sm:$0xff]
  %v771 = vld [vmem:[%s765 + $0x28] sm:$0xff]
  %v772 = vld [vmem:[%s765 + $0x30] sm:$0xff]
  %v773 = vld [vmem:[%s765 + $0x38] sm:$0xff]
  %v774 = vld [vmem:[%s765 + $0x40] sm:$0xff]
  %v775 = vld [vmem:[%s765 + $0x48] sm:$0xff]
  %v776 = vld [vmem:[%s765 + $0x50] sm:$0xff]
  %v777 = vld [vmem:[%s765 + $0x58] sm:$0xff]
  %v778 = vld [vmem:[%s765 + $0x60] sm:$0xff]
  %v779 = vld [vmem:[%s765 + $0x68] sm:$0xff]
  %v780 = vld [vmem:[%s765 + $0x70] sm:$0xff]
  %v781 = vld [vmem:[%s765 + $0x78] sm:$0xff]
  %782 = vmatprep.subr.mxu0 0.0
  %783 = vmatpush1.msra.mxu0 %v781
  %784 = vmatprep.subr.mxu0 0.0
  %785 = vmatpush1.msra.mxu0 %v780
  %786 = vmatprep.subr.mxu0 0.0
  %787 = vmatpush1.msra.mxu0 %v779
  %788 = vmatprep.subr.mxu0 0.0
  %789 = vmatpush1.msra.mxu0 %v778
  %790 = vmatprep.subr.mxu0 0.0
  %791 = vmatpush1.msra.mxu0 %v777
  %792 = vmatprep.subr.mxu0 0.0
  %793 = vmatpush1.msra.mxu0 %v776
  %794 = vmatprep.subr.mxu0 0.0
  %795 = vmatpush1.msra.mxu0 %v775
  %796 = vmatprep.subr.mxu0 0.0
  %797 = vmatpush1.msra.mxu0 %v774
  %798 = vmatprep.subr.mxu0 0.0
  %799 = vmatpush1.msra.mxu0 %v773
  %800 = vmatprep.subr.mxu0 0.0
  %801 = vmatpush1.msra.mxu0 %v772
  %802 = vmatprep.subr.mxu0 0.0
  %803 = vmatpush1.msra.mxu0 %v771
  %804 = vmatprep.subr.mxu0 0.0
  %805 = vmatpush1.msra.mxu0 %v770
  %806 = vmatprep.subr.mxu0 0.0
  %807 = vmatpush1.msra.mxu0 %v769
  %808 = vmatprep.subr.mxu0 0.0
  %809 = vmatpush1.msra.mxu0 %v768
  %810 = vmatprep.subr.mxu0 0.0
  %811 = vmatpush1.msra.mxu0 %v767
  %812 = vmatprep.subr.mxu0 0.0
  %813 = vmatpush1.msra.mxu0 %v766
  %814 = vmatprep.subr.mxu0 0.0
  %815 = vmatpush2.msra.mxu0 0.0
  %816 = vmatprep.subr.mxu0 0.0
  %817 = vmatpush2.msra.mxu0 0.0
  %818 = vmatprep.subr.mxu0 0.0
  %819 = vmatpush2.msra.mxu0 0.0
  %820 = vmatprep.subr.mxu0 0.0
  %821 = vmatpush2.msra.mxu0 0.0
  %822 = vmatprep.subr.mxu0 0.0
  %823 = vmatpush2.msra.mxu0 0.0
  %824 = vmatprep.subr.mxu0 0.0
  %825 = vmatpush2.msra.mxu0 0.0
  %826 = vmatprep.subr.mxu0 0.0
  %827 = vmatpush2.msra.mxu0 0.0
  %828 = vmatprep.subr.mxu0 0.0
  %829 = vmatpush2.msra.mxu0 0.0
  %830 = vmatprep.subr.mxu0 0.0
  %831 = vmatpush2.msra.mxu0 0.0
  %832 = vmatprep.subr.mxu0 0.0
  %833 = vmatpush2.msra.mxu0 0.0
  %834 = vmatprep.subr.mxu0 0.0
  %835 = vmatpush2.msra.mxu0 0.0
  %836 = vmatprep.subr.mxu0 0.0
  %837 = vmatpush2.msra.mxu0 0.0
  %838 = vmatprep.subr.mxu0 0.0
  %839 = vmatpush2.msra.mxu0 0.0
  %840 = vmatprep.subr.mxu0 0.0
  %841 = vmatpush2.msra.mxu0 0.0
  %842 = vmatprep.subr.mxu0 0.0
  %843 = vmatpush2.msra.mxu0 0.0
  %844 = vmatprep.subr.mxu0 0.0
  %845 = vmatpush2.msra.mxu0 0.0
  %846 = vmatprep.mubr.f32.mxu0 0.0
  %847 = vmatmul.mubr.f32.gmra.mxu0 %v655
  %v848 = vpop.f32.mrf.mxu0
  %v849 = vadd.f32 0.0, %v848
  %v850 = vpop.f32.mrf.mxu0
  %851 = vmatprep.mubr.f32.mxu0 0.0
  %852 = vmatmul.mubr.f32.gmra.mxu0 %v656
  %v853 = vpop.f32.mrf.mxu0
  %v854 = vadd.f32 0.0, %v853
  %v855 = vpop.f32.mrf.mxu0
  %856 = vdwg.mxu0
  %857 = vmatprep.subr.mxu0 0.0
  %858 = vmatpush1.msra.mxu0 0.0
  %859 = vmatprep.subr.mxu0 0.0
  %860 = vmatpush1.msra.mxu0 0.0
  %861 = vmatprep.subr.mxu0 0.0
  %862 = vmatpush1.msra.mxu0 0.0
  %863 = vmatprep.subr.mxu0 0.0
  %864 = vmatpush1.msra.mxu0 0.0
  %865 = vmatprep.subr.mxu0 0.0
  %866 = vmatpush1.msra.mxu0 0.0
  %867 = vmatprep.subr.mxu0 0.0
  %868 = vmatpush1.msra.mxu0 0.0
  %869 = vmatprep.subr.mxu0 0.0
  %870 = vmatpush1.msra.mxu0 0.0
  %871 = vmatprep.subr.mxu0 0.0
  %872 = vmatpush1.msra.mxu0 0.0
  %873 = vmatprep.subr.mxu0 0.0
  %874 = vmatpush1.msra.mxu0 0.0
  %875 = vmatprep.subr.mxu0 0.0
  %876 = vmatpush1.msra.mxu0 0.0
  %877 = vmatprep.subr.mxu0 0.0
  %878 = vmatpush1.msra.mxu0 0.0
  %879 = vmatprep.subr.mxu0 0.0
  %880 = vmatpush1.msra.mxu0 0.0
  %881 = vmatprep.subr.mxu0 0.0
  %882 = vmatpush1.msra.mxu0 0.0
  %883 = vmatprep.subr.mxu0 0.0
  %884 = vmatpush1.msra.mxu0 0.0
  %885 = vmatprep.subr.mxu0 0.0
  %886 = vmatpush1.msra.mxu0 %v745
  %887 = vmatprep.subr.mxu0 0.0
  %888 = vmatpush1.msra.mxu0 %v740
  %889 = vmatprep.subr.mxu0 0.0
  %890 = vmatpush2.msra.mxu0 0.0
  %891 = vmatprep.subr.mxu0 0.0
  %892 = vmatpush2.msra.mxu0 0.0
  %893 = vmatprep.subr.mxu0 0.0
  %894 = vmatpush2.msra.mxu0 0.0
  %895 = vmatprep.subr.mxu0 0.0
  %896 = vmatpush2.msra.mxu0 0.0
  %897 = vmatprep.subr.mxu0 0.0
  %898 = vmatpush2.msra.mxu0 0.0
  %899 = vmatprep.subr.mxu0 0.0
  %900 = vmatpush2.msra.mxu0 0.0
  %901 = vmatprep.subr.mxu0 0.0
  %902 = vmatpush2.msra.mxu0 0.0
  %903 = vmatprep.subr.mxu0 0.0
  %904 = vmatpush2.msra.mxu0 0.0
  %905 = vmatprep.subr.mxu0 0.0
  %906 = vmatpush2.msra.mxu0 0.0
  %907 = vmatprep.subr.mxu0 0.0
  %908 = vmatpush2.msra.mxu0 0.0
  %909 = vmatprep.subr.mxu0 0.0
  %910 = vmatpush2.msra.mxu0 0.0
  %911 = vmatprep.subr.mxu0 0.0
  %912 = vmatpush2.msra.mxu0 0.0
  %913 = vmatprep.subr.mxu0 0.0
  %914 = vmatpush2.msra.mxu0 0.0
  %915 = vmatprep.subr.mxu0 0.0
  %916 = vmatpush2.msra.mxu0 0.0
  %917 = vmatprep.subr.mxu0 0.0
  %918 = vmatpush2.msra.mxu0 0.0
  %919 = vmatprep.subr.mxu0 0.0
  %920 = vmatpush2.msra.mxu0 0.0
  %921 = vmatprep.mubr.f32.mxu0 0.0
  %922 = vmatmul.mubr.f32.gmra.mxu0 %v242
  %v923 = vpop.f32.mrf.mxu0
  %v924 = vadd.f32 0.0, %v923
  %v925 = vpop.f32.mrf.mxu0
  %926 = vmatprep.mubr.f32.mxu0 0.0
  %927 = vmatmul.mubr.f32.gmra.mxu0 %v245
  %v928 = vpop.f32.mrf.mxu0
  %v929 = vadd.f32 0.0, %v928
  %v930 = vpop.f32.mrf.mxu0
  %931 = vdwg.mxu0
  %932 = vmatprep.subr.mxu0 0.0
  %933 = vmatpush1.msra.mxu0 0.0
  %934 = vmatprep.subr.mxu0 0.0
  %935 = vmatpush1.msra.mxu0 0.0
  %936 = vmatprep.subr.mxu0 0.0
  %937 = vmatpush1.msra.mxu0 0.0
  %938 = vmatprep.subr.mxu0 0.0
  %939 = vmatpush1.msra.mxu0 0.0
  %940 = vmatprep.subr.mxu0 0.0
  %941 = vmatpush1.msra.mxu0 0.0
  %942 = vmatprep.subr.mxu0 0.0
  %943 = vmatpush1.msra.mxu0 0.0
  %944 = vmatprep.subr.mxu0 0.0
  %945 = vmatpush1.msra.mxu0 0.0
  %946 = vmatprep.subr.mxu0 0.0
  %947 = vmatpush1.msra.mxu0 0.0
  %948 = vmatprep.subr.mxu0 0.0
  %949 = vmatpush1.msra.mxu0 0.0
  %950 = vmatprep.subr.mxu0 0.0
  %951 = vmatpush1.msra.mxu0 0.0
  %952 = vmatprep.subr.mxu0 0.0
  %953 = vmatpush1.msra.mxu0 0.0
  %954 = vmatprep.subr.mxu0 0.0
  %955 = vmatpush1.msra.mxu0 0.0
  %956 = vmatprep.subr.mxu0 0.0
  %957 = vmatpush1.msra.mxu0 0.0
  %958 = vmatprep.subr.mxu0 0.0
  %959 = vmatpush1.msra.mxu0 0.0
  %960 = vmatprep.subr.mxu0 0.0
  %961 = vmatpush1.msra.mxu0 %v854
  %962 = vmatprep.subr.mxu0 0.0
  %963 = vmatpush1.msra.mxu0 %v849
  %964 = vmatprep.subr.mxu0 0.0
  %965 = vmatpush2.msra.mxu0 0.0
  %966 = vmatprep.subr.mxu0 0.0
  %967 = vmatpush2.msra.mxu0 0.0
  %968 = vmatprep.subr.mxu0 0.0
  %969 = vmatpush2.msra.mxu0 0.0
  %970 = vmatprep.subr.mxu0 0.0
  %971 = vmatpush2.msra.mxu0 0.0
  %972 = vmatprep.subr.mxu0 0.0
  %973 = vmatpush2.msra.mxu0 0.0
  %974 = vmatprep.subr.mxu0 0.0
  %975 = vmatpush2.msra.mxu0 0.0
  %976 = vmatprep.subr.mxu0 0.0
  %977 = vmatpush2.msra.mxu0 0.0
  %978 = vmatprep.subr.mxu0 0.0
  %979 = vmatpush2.msra.mxu0 0.0
  %980 = vmatprep.subr.mxu0 0.0
  %981 = vmatpush2.msra.mxu0 0.0
  %982 = vmatprep.subr.mxu0 0.0
  %983 = vmatpush2.msra.mxu0 0.0
  %984 = vmatprep.subr.mxu0 0.0
  %985 = vmatpush2.msra.mxu0 0.0
  %986 = vmatprep.subr.mxu0 0.0
  %987 = vmatpush2.msra.mxu0 0.0
  %988 = vmatprep.subr.mxu0 0.0
  %989 = vmatpush2.msra.mxu0 0.0
  %990 = vmatprep.subr.mxu0 0.0
  %991 = vmatpush2.msra.mxu0 0.0
  %992 = vmatprep.subr.mxu0 0.0
  %993 = vmatpush2.msra.mxu0 0.0
  %994 = vmatprep.subr.mxu0 0.0
  %995 = vmatpush2.msra.mxu0 0.0
  %996 = vmatprep.mubr.f32.mxu0 0.0
  %997 = vmatmul.mubr.f32.gmra.mxu0 %v326
  %v998 = vpop.f32.mrf.mxu0
  %v999 = vadd.f32 0.0, %v998
  %v1000 = vpop.f32.mrf.mxu0
  %1001 = vmatprep.mubr.f32.mxu0 0.0
  %1002 = vmatmul.mubr.f32.gmra.mxu0 %v329
  %v1003 = vpop.f32.mrf.mxu0
  %v1004 = vadd.f32 0.0, %v1003
  %v1005 = vpop.f32.mrf.mxu0
  %1006 = vdwg.mxu0
  %1007 = vmatprep.subr.mxu0 0.0
  %1008 = vmatpush1.msra.mxu0 %v764
  %1009 = vmatprep.subr.mxu0 0.0
  %1010 = vmatpush1.msra.mxu0 %v763
  %1011 = vmatprep.subr.mxu0 0.0
  %1012 = vmatpush1.msra.mxu0 %v762
  %1013 = vmatprep.subr.mxu0 0.0
  %1014 = vmatpush1.msra.mxu0 %v761
  %1015 = vmatprep.subr.mxu0 0.0
  %1016 = vmatpush1.msra.mxu0 %v760
  %1017 = vmatprep.subr.mxu0 0.0
  %1018 = vmatpush1.msra.mxu0 %v759
  %1019 = vmatprep.subr.mxu0 0.0
  %1020 = vmatpush1.msra.mxu0 %v758
  %1021 = vmatprep.subr.mxu0 0.0
  %1022 = vmatpush1.msra.mxu0 %v757
  %1023 = vmatprep.subr.mxu0 0.0
  %1024 = vmatpush1.msra.mxu0 %v756
  %1025 = vmatprep.subr.mxu0 0.0
  %1026 = vmatpush1.msra.mxu0 %v755
  %1027 = vmatprep.subr.mxu0 0.0
  %1028 = vmatpush1.msra.mxu0 %v754
  %1029 = vmatprep.subr.mxu0 0.0
  %1030 = vmatpush1.msra.mxu0 %v753
  %1031 = vmatprep.subr.mxu0 0.0
  %1032 = vmatpush1.msra.mxu0 %v752
  %1033 = vmatprep.subr.mxu0 0.0
  %1034 = vmatpush1.msra.mxu0 %v751
  %1035 = vmatprep.subr.mxu0 0.0
  %1036 = vmatpush1.msra.mxu0 %v750
  %1037 = vmatprep.subr.mxu0 0.0
  %1038 = vmatpush1.msra.mxu0 %v749
  %1039 = vmatprep.subr.mxu0 0.0
  %1040 = vmatpush2.msra.mxu0 0.0
  %1041 = vmatprep.subr.mxu0 0.0
  %1042 = vmatpush2.msra.mxu0 0.0
  %1043 = vmatprep.subr.mxu0 0.0
  %1044 = vmatpush2.msra.mxu0 0.0
  %1045 = vmatprep.subr.mxu0 0.0
  %1046 = vmatpush2.msra.mxu0 0.0
  %1047 = vmatprep.subr.mxu0 0.0
  %1048 = vmatpush2.msra.mxu0 0.0
  %1049 = vmatprep.subr.mxu0 0.0
  %1050 = vmatpush2.msra.mxu0 0.0
  %1051 = vmatprep.subr.mxu0 0.0
  %1052 = vmatpush2.msra.mxu0 0.0
  %1053 = vmatprep.subr.mxu0 0.0
  %1054 = vmatpush2.msra.mxu0 0.0
  %1055 = vmatprep.subr.mxu0 0.0
  %1056 = vmatpush2.msra.mxu0 0.0
  %1057 = vmatprep.subr.mxu0 0.0
  %1058 = vmatpush2.msra.mxu0 0.0
  %1059 = vmatprep.subr.mxu0 0.0
  %1060 = vmatpush2.msra.mxu0 0.0
  %1061 = vmatprep.subr.mxu0 0.0
  %1062 = vmatpush2.msra.mxu0 0.0
  %1063 = vmatprep.subr.mxu0 0.0
  %1064 = vmatpush2.msra.mxu0 0.0
  %1065 = vmatprep.subr.mxu0 0.0
  %1066 = vmatpush2.msra.mxu0 0.0
  %1067 = vmatprep.subr.mxu0 0.0
  %1068 = vmatpush2.msra.mxu0 0.0
  %1069 = vmatprep.subr.mxu0 0.0
  %1070 = vmatpush2.msra.mxu0 0.0
  %1071 = vmatprep.mubr.f32.mxu0 0.0
  %1072 = vmatmul.mubr.f32.gmra.mxu0 %v655
  %v1073 = vpop.f32.mrf.mxu0
  %v1074 = vadd.f32 %v924, %v1073
  %v1075 = vpop.f32.mrf.mxu0
  %1076 = vmatprep.mubr.f32.mxu0 0.0
  %1077 = vmatmul.mubr.f32.gmra.mxu0 %v656
  %v1078 = vpop.f32.mrf.mxu0
  %v1079 = vadd.f32 %v929, %v1078
  %v1080 = vpop.f32.mrf.mxu0
  %1081 = vdwg.mxu0
  %v1082 = vadd.f32 %v1074, %v999
  %v1083 = vadd.f32 %v1079, %v1004
  %v1084 = vadd.f32 %v1082, %v1083
  %v1085 = vrot.slane %v1084, 4
  %v1086 = vadd.f32 %v1084, %v1085
  %v1087 = vrot.slane %v1086, 2
  %v1088 = vadd.f32 %v1086, %v1087
  %v1089 = vrot.slane %v1088, 1
  %v1090 = vadd.f32 %v1088, %v1089
  %v1091 = vmul.f32 %v1082, %v1082
  %v1092 = vmul.f32 %v1083, %v1083
  %v1093 = vadd.f32 %v1091, %v1092
  %v1094 = vrot.slane %v1093, 4
  %v1095 = vadd.f32 %v1093, %v1094
  %v1096 = vrot.slane %v1095, 2
  %v1097 = vadd.f32 %v1095, %v1096
  %v1098 = vrot.slane %v1097, 1
  %v1099 = vadd.f32 %v1097, %v1098
  %1100 = vmatprep.subr.mxu0 0.0
  %1101 = vmatpush1.msra.mxu0 %v37
  %1102 = vmatprep.subr.mxu0 0.0
  %1103 = vmatpush1.msra.mxu0 %v36
  %1104 = vmatprep.subr.mxu0 0.0
  %1105 = vmatpush1.msra.mxu0 %v35
  %1106 = vmatprep.subr.mxu0 0.0
  %1107 = vmatpush1.msra.mxu0 %v34
  %1108 = vmatprep.subr.mxu0 0.0
  %1109 = vmatpush1.msra.mxu0 %v33
  %1110 = vmatprep.subr.mxu0 0.0
  %1111 = vmatpush1.msra.mxu0 %v32
  %1112 = vmatprep.subr.mxu0 0.0
  %1113 = vmatpush1.msra.mxu0 %v31
  %1114 = vmatprep.subr.mxu0 0.0
  %1115 = vmatpush1.msra.mxu0 %v30
  %1116 = vmatprep.subr.mxu0 0.0
  %1117 = vmatpush1.msra.mxu0 %v29
  %1118 = vmatprep.subr.mxu0 0.0
  %1119 = vmatpush1.msra.mxu0 %v28
  %1120 = vmatprep.subr.mxu0 0.0
  %1121 = vmatpush1.msra.mxu0 %v27
  %1122 = vmatprep.subr.mxu0 0.0
  %1123 = vmatpush1.msra.mxu0 %v26
  %1124 = vmatprep.subr.mxu0 0.0
  %1125 = vmatpush1.msra.mxu0 %v25
  %1126 = vmatprep.subr.mxu0 0.0
  %1127 = vmatpush1.msra.mxu0 %v24
  %1128 = vmatprep.subr.mxu0 0.0
  %1129 = vmatpush1.msra.mxu0 %v23
  %1130 = vmatprep.subr.mxu0 0.0
  %1131 = vmatpush1.msra.mxu0 %v22
  %1132 = vmatprep.subr.mxu0 0.0
  %1133 = vmatpush2.msra.mxu0 0.0
  %1134 = vmatprep.subr.mxu0 0.0
  %1135 = vmatpush2.msra.mxu0 0.0
  %1136 = vmatprep.subr.mxu0 0.0
  %1137 = vmatpush2.msra.mxu0 0.0
  %1138 = vmatprep.subr.mxu0 0.0
  %1139 = vmatpush2.msra.mxu0 0.0
  %1140 = vmatprep.subr.mxu0 0.0
  %1141 = vmatpush2.msra.mxu0 0.0
  %1142 = vmatprep.subr.mxu0 0.0
  %1143 = vmatpush2.msra.mxu0 0.0
  %1144 = vmatprep.subr.mxu0 0.0
  %1145 = vmatpush2.msra.mxu0 0.0
  %1146 = vmatprep.subr.mxu0 0.0
  %1147 = vmatpush2.msra.mxu0 0.0
  %1148 = vmatprep.subr.mxu0 0.0
  %1149 = vmatpush2.msra.mxu0 0.0
  %1150 = vmatprep.subr.mxu0 0.0
  %1151 = vmatpush2.msra.mxu0 0.0
  %1152 = vmatprep.subr.mxu0 0.0
  %1153 = vmatpush2.msra.mxu0 0.0
  %1154 = vmatprep.subr.mxu0 0.0
  %1155 = vmatpush2.msra.mxu0 0.0
  %1156 = vmatprep.subr.mxu0 0.0
  %1157 = vmatpush2.msra.mxu0 0.0
  %1158 = vmatprep.subr.mxu0 0.0
  %1159 = vmatpush2.msra.mxu0 0.0
  %1160 = vmatprep.subr.mxu0 0.0
  %1161 = vmatpush2.msra.mxu0 0.0
  %1162 = vmatprep.subr.mxu0 0.0
  %1163 = vmatpush2.msra.mxu0 0.0
  %1164 = vmatprep.mubr.f32.mxu0 0.0
  %1165 = vmatmul.mubr.f32.gmra.mxu0 %v1090
  %v1166 = vpop.f32.mrf.mxu0
  %v1167 = vadd.f32 0.0, %v1166
  %v1168 = vpop.f32.mrf.mxu0
  %1169 = vdwg.mxu0
  %1170 = vmatprep.subr.mxu0 0.0
  %1171 = vmatpush1.msra.mxu0 %v37
  %1172 = vmatprep.subr.mxu0 0.0
  %1173 = vmatpush1.msra.mxu0 %v36
  %1174 = vmatprep.subr.mxu0 0.0
  %1175 = vmatpush1.msra.mxu0 %v35
  %1176 = vmatprep.subr.mxu0 0.0
  %1177 = vmatpush1.msra.mxu0 %v34
  %1178 = vmatprep.subr.mxu0 0.0
  %1179 = vmatpush1.msra.mxu0 %v33
  %1180 = vmatprep.subr.mxu0 0.0
  %1181 = vmatpush1.msra.mxu0 %v32
  %1182 = vmatprep.subr.mxu0 0.0
  %1183 = vmatpush1.msra.mxu0 %v31
  %1184 = vmatprep.subr.mxu0 0.0
  %1185 = vmatpush1.msra.mxu0 %v30
  %1186 = vmatprep.subr.mxu0 0.0
  %1187 = vmatpush1.msra.mxu0 %v29
  %1188 = vmatprep.subr.mxu0 0.0
  %1189 = vmatpush1.msra.mxu0 %v28
  %1190 = vmatprep.subr.mxu0 0.0
  %1191 = vmatpush1.msra.mxu0 %v27
  %1192 = vmatprep.subr.mxu0 0.0
  %1193 = vmatpush1.msra.mxu0 %v26
  %1194 = vmatprep.subr.mxu0 0.0
  %1195 = vmatpush1.msra.mxu0 %v25
  %1196 = vmatprep.subr.mxu0 0.0
  %1197 = vmatpush1.msra.mxu0 %v24
  %1198 = vmatprep.subr.mxu0 0.0
  %1199 = vmatpush1.msra.mxu0 %v23
  %1200 = vmatprep.subr.mxu0 0.0
  %1201 = vmatpush1.msra.mxu0 %v22
  %1202 = vmatprep.subr.mxu0 0.0
  %1203 = vmatpush2.msra.mxu0 0.0
  %1204 = vmatprep.subr.mxu0 0.0
  %1205 = vmatpush2.msra.mxu0 0.0
  %1206 = vmatprep.subr.mxu0 0.0
  %1207 = vmatpush2.msra.mxu0 0.0
  %1208 = vmatprep.subr.mxu0 0.0
  %1209 = vmatpush2.msra.mxu0 0.0
  %1210 = vmatprep.subr.mxu0 0.0
  %1211 = vmatpush2.msra.mxu0 0.0
  %1212 = vmatprep.subr.mxu0 0.0
  %1213 = vmatpush2.msra.mxu0 0.0
  %1214 = vmatprep.subr.mxu0 0.0
  %1215 = vmatpush2.msra.mxu0 0.0
  %1216 = vmatprep.subr.mxu0 0.0
  %1217 = vmatpush2.msra.mxu0 0.0
  %1218 = vmatprep.subr.mxu0 0.0
  %1219 = vmatpush2.msra.mxu0 0.0
  %1220 = vmatprep.subr.mxu0 0.0
  %1221 = vmatpush2.msra.mxu0 0.0
  %1222 = vmatprep.subr.mxu0 0.0
  %1223 = vmatpush2.msra.mxu0 0.0
  %1224 = vmatprep.subr.mxu0 0.0
  %1225 = vmatpush2.msra.mxu0 0.0
  %1226 = vmatprep.subr.mxu0 0.0
  %1227 = vmatpush2.msra.mxu0 0.0
  %1228 = vmatprep.subr.mxu0 0.0
  %1229 = vmatpush2.msra.mxu0 0.0
  %1230 = vmatprep.subr.mxu0 0.0
  %1231 = vmatpush2.msra.mxu0 0.0
  %1232 = vmatprep.subr.mxu0 0.0
  %1233 = vmatpush2.msra.mxu0 0.0
  %1234 = vmatprep.mubr.f32.mxu0 0.0
  %1235 = vmatmul.mubr.f32.gmra.mxu0 %v1099
  %v1236 = vpop.f32.mrf.mxu0
  %v1237 = vadd.f32 0.0, %v1236
  %v1238 = vpop.f32.mrf.mxu0
  %1239 = vdwg.mxu0
  %v1240 = vmul.f32 %v1167, %v1167
  %v1241 = vsub.f32 %v1237, %v1240
  %v1242 = vadd.f32 %v1241, 1e-05
  %v1243 = vrsqrt.pop %v1242
  %v1244 = vlaneseq
  %v1245 = vshrl.u32 %v1244, 7
  %v1246 = vsub.s32 0, %v1245
  %v1247 = vrot.slane %v1167, %v1246
  %v1248 = vsub.f32 %v1082, %v1247
  %v1249 = vsub.f32 %v1083, %v1247
  %v1250 = vlaneseq
  %v1251 = vshrl.u32 %v1250, 7
  %v1252 = vsub.s32 0, %v1251
  %v1253 = vrot.slane %v1243, %v1252
  %v1254 = vmul.f32 %v1248, %v1253
  %v1255 = vmul.f32 %v1249, %v1253
  %v1256 = vadd.f32 %v1254, %v20
  %v1257 = vadd.f32 %v1255, %v21
  %v1258 = vmax.f32 %v1256, 0.0
  %v1259 = vmax.f32 %v1257, 0.0
  %1260 = vst [vmem:[%s5] sm:$0xff] %v1258
  %1261 = vst [vmem:[%s5 + $0x8] sm:$0xff] %v1259
  // Predicated region
  $region22: #{basic_block.1} parent=0 // pred_check
    _
  $region23: #{basic_block.1} parent=0 // pred_check_branch
    %1263 = sbr.rel (0) target = $region25
  $region24: #{basic_block.1} parent=0 // pred_region
    _
  $region25: #{basic_block.1} parent=0 // pred_fallthru
    _
  // Predicated region
  $region26: #{basic_block.1} parent=0 // pred_check
    _
  $region27: #{basic_block.1} parent=0 // pred_check_branch
    %1265 = sbr.rel (0) target = $region29
  $region28: #{basic_block.1} parent=0 // pred_region
    _
  $region29: #{basic_block.1} parent=0 // pred_fallthru
    _

</llo_original>
